<compile_context>
chip_gen: v6e
topology: v6e:2x2x1
jax: 0.10.0
libtpu: 0.0.40
codegen_flags: <defaults>
</compile_context>

<pallas_src>
import numpy as np
import jax
import jax.numpy as jnp
from jax import lax
from jax.experimental import pallas as pl
from jax.experimental.pallas import tpu as pltpu

LANE = 128


def _round_up(x, m):
    return (x + m - 1) // m * m


def make_se_bottleneck_kernel(W, M):
    """Kernel body closed over the static geometry (image width W, total rows M=N*H*W)."""

    def kernel(x_ref, tapmask_ref, poolavg_ref, poolbcast_ref,
               w1_ref, b1_ref, w2_ref, b2_ref, w3_ref, b3_ref,
               wfc1_ref, wfc2_ref, o_ref):
        x_f32 = x_ref[...]                                   # (M, Cp) f32, residual path
        x_bf = x_f32.astype(jnp.bfloat16)

        # conv1 (1x1, bn1 scale folded into the weights) + bias + relu
        h1 = jnp.dot(x_bf, w1_ref[...], preferred_element_type=jnp.float32)
        h1 = jnp.maximum(h1 + b1_ref[...], 0.0)              # (M, Pp) f32

        # conv2 (3x3, stride=1, pad=1): tap (dy, dx) at flat pixel r reads h1[r + dy*W + dx]
        # (zero outside the image).  Shift = sublane rotation (XLU slot); image/row boundaries
        # are handled by precomputed {0,1} masks; all 9 taps fused into ONE matmul, K = 9*Pp.
        taps = []
        k = 0
        for dy in (-1, 0, 1):
            for dx in (-1, 0, 1):
                off = dy * W + dx
                shifted = pltpu.roll(h1, (-off) % M, axis=0) if off != 0 else h1
                taps.append((shifted * tapmask_ref[k]).astype(jnp.bfloat16))
                k += 1
        h1_taps = jnp.concatenate(taps, axis=1)              # (M, 9*Pp) bf16, lane-aligned
        h2 = jnp.dot(h1_taps, w2_ref[...], preferred_element_type=jnp.float32)
        h2 = jnp.maximum(h2 + b2_ref[...], 0.0)               # (M, Pp) f32

        # conv3 (1x1, bn3 scale folded) + bias
        h3 = jnp.dot(h2.astype(jnp.bfloat16), w3_ref[...],
                     preferred_element_type=jnp.float32)
        h3 = h3 + b3_ref[...]                                  # (M, C4p) f32

        # SELayer: per-image global average pool -> fc -> relu -> fc -> sigmoid -> scale.
        # Pool / broadcast as exact segment matmuls (f32: tiny, keeps the gate precise).
        y = jnp.dot(poolavg_ref[...], h3, preferred_element_type=jnp.float32)       # (N, C4p)
        z = jnp.dot(y.astype(jnp.bfloat16), wfc1_ref[...],
                    preferred_element_type=jnp.float32)
        z = jnp.maximum(z, 0.0)
        g = jax.nn.sigmoid(jnp.dot(z.astype(jnp.bfloat16), wfc2_ref[...],
                                   preferred_element_type=jnp.float32))              # (N, C4p)
        gate = jnp.dot(poolbcast_ref[...], g, preferred_element_type=jnp.float32)    # (M, C4p)

        # channel gate + residual add (downsample is None); no relu after the add (per module).
        o_ref[...] = h3 * gate + x_f32

    return kernel


def se_bottleneck_pallas(x_nchw, kp):
    N, Cin, H, W = x_nchw.shape
    HW = H * W
    M = N * HW
    Cp, Pp = kp["w1"].shape
    C4p = kp["w3"].shape[1]
    C4 = kp["c4"]

    # NCHW -> (rows = pixels, lanes = channels), zero-padded to Cp=128 lanes, kept in f32.
    x_flat = jnp.transpose(x_nchw, (0, 2, 3, 1)).reshape(M, Cin)
    x_pad = jnp.pad(x_flat, ((0, 0), (0, Cp - Cin)))

    # Host-precomputed {0,1} boundary masks for the 9 conv2 taps and the per-image SE pooling
    # matrices (exact, tiny, removes all in-kernel integer div/mod).
    r = np.arange(M)
    i = (r % HW) // W
    j = r % W
    n = r // HW
    tap_mask = np.zeros((9, M, 1), np.float32)
    k = 0
    for dy in (-1, 0, 1):
        for dx in (-1, 0, 1):
            ok = (i + dy >= 0) & (i + dy < H) & (j + dx >= 0) & (j + dx < W)
            tap_mask[k, :, 0] = ok.astype(np.float32)
            k += 1
    pool_avg = (n[None, :] == np.arange(N)[:, None]).astype(np.float32) / HW   # (N, M)
    pool_bcast = (n[:, None] == np.arange(N)[None, :]).astype(np.float32)      # (M, N)

    operands = [x_pad, jnp.asarray(tap_mask), jnp.asarray(pool_avg), jnp.asarray(pool_bcast),
                kp["w1"], kp["b1"], kp["w2"], kp["b2"], kp["w3"], kp["b3"],
                kp["wfc1"], kp["wfc2"]]

    # Whole problem fits one lane-dense VMEM block -> grid=(1,), full-array BlockSpecs.
    # (For larger N*H*W, tile the M axis with a "parallel" grid axis to use v7x's 2 TCs.)
    in_specs = [pl.BlockSpec(a.shape, lambda _, nd=a.ndim: (0,) * nd) for a in operands]
    out_spec = pl.BlockSpec((M, C4p), lambda _: (0, 0))

    midp = kp["wfc1"].shape[1]
    flops = (2 * M * (Cp * Pp + 9 * Pp * Pp + Pp * C4p)
             + 2 * N * (M * C4p + C4p * midp + midp * C4p)
             + 2 * M * N * C4p)
    bytes_accessed = sum(int(np.prod(a.shape)) * a.dtype.itemsize for a in operands) \
        + M * C4p * 4
    cost = pl.CostEstimate(flops=int(flops), transcendentals=int(N * C4p),
                           bytes_accessed=int(bytes_accessed))

    out_flat = pl.pallas_call(
        make_se_bottleneck_kernel(W, M),
        out_shape=jax.ShapeDtypeStruct((M, C4p), jnp.float32),
        grid=(1,),
        in_specs=in_specs,
        out_specs=out_spec,
        compiler_params=pltpu.CompilerParams(
            dimension_semantics=("arbitrary",),
            vmem_limit_bytes=32 * 1024 * 1024),
        cost_estimate=cost,
    )(*operands)

    out = out_flat[:, :C4].reshape(N, H, W, C4)
    return jnp.transpose(out, (0, 3, 1, 2))


def reference_jax(x, raw):
    """Pure-JAX/XLA reference of the PyTorch forward (eval-mode BN)."""
    dn = ("NCHW", "OIHW", "NCHW")
    prec = lax.Precision.HIGHEST

    def bn(h, scale, shift):
        return h * scale.reshape(1, -1, 1, 1) + shift.reshape(1, -1, 1, 1)

    h = lax.conv_general_dilated(x, raw["w1_oihw"], (1, 1), "VALID",
                                 dimension_numbers=dn, precision=prec)
    h = jax.nn.relu(bn(h, raw["s1"], raw["b1"]))
    h = lax.conv_general_dilated(h, raw["w2_oihw"], (1, 1), ((1, 1), (1, 1)),
                                 dimension_numbers=dn, precision=prec)
    h = jax.nn.relu(bn(h, raw["s2"], raw["b2"]))
    h = lax.conv_general_dilated(h, raw["w3_oihw"], (1, 1), "VALID",
                                 dimension_numbers=dn, precision=prec)
    h = bn(h, raw["s3"], raw["b3"])
    y = jnp.mean(h, axis=(2, 3))                                      # (N, C4)
    z = jax.nn.relu(jnp.dot(y, raw["fc1_w"].T, precision=prec))
    g = jax.nn.sigmoid(jnp.dot(z, raw["fc2_w"].T, precision=prec))
    h = h * g[:, :, None, None]
    return h + x


def build_params(key, inplanes, planes, reduction):
    C4 = planes * 4
    mid = C4 // reduction
    ks = jax.random.split(key, 8)

    w1_oihw = 0.1 * jax.random.normal(ks[0], (planes, inplanes, 1, 1), jnp.float32)
    w2_oihw = 0.1 * jax.random.normal(ks[1], (planes, planes, 3, 3), jnp.float32)
    w3_oihw = 0.1 * jax.random.normal(ks[2], (C4, planes, 1, 1), jnp.float32)
    fc1_w = 0.1 * jax.random.normal(ks[3], (mid, C4), jnp.float32)   # PyTorch Linear (out, in)
    fc2_w = 0.1 * jax.random.normal(ks[4], (C4, mid), jnp.float32)

    def bn_fold(k, c):
        k1, k2, k3, k4 = jax.random.split(k, 4)
        gamma = 1.0 + 0.1 * jax.random.normal(k1, (c,), jnp.float32)
        beta = 0.1 * jax.random.normal(k2, (c,), jnp.float32)
        mean = 0.1 * jax.random.normal(k3, (c,), jnp.float32)
        var = 1.0 + 0.1 * jax.random.uniform(k4, (c,), jnp.float32)
        scale = gamma / jnp.sqrt(var + 1e-5)
        shift = beta - mean * scale
        return scale, shift

    s1, b1 = bn_fold(ks[5], planes)
    s2, b2 = bn_fold(ks[6], planes)
    s3, b3 = bn_fold(ks[7], C4)

    raw = dict(w1_oihw=w1_oihw, w2_oihw=w2_oihw, w3_oihw=w3_oihw,
               fc1_w=fc1_w, fc2_w=fc2_w, s1=s1, b1=b1, s2=s2, b2=b2, s3=s3, b3=b3)

    # Kernel-side params: fold BN scales into the conv weights, zero-pad every channel dim to
    # 128 lanes, cast matmul operands to bf16 (biases stay f32).
    Cp = _round_up(inplanes, LANE)
    Pp = _round_up(planes, LANE)
    C4p = _round_up(C4, LANE)
    midp = _round_up(mid, LANE)

    def pad2(a, rows, cols):
        return jnp.pad(a, ((0, rows - a.shape[0]), (0, cols - a.shape[1])))

    def padrow(v, cols):
        return jnp.pad(v.reshape(1, -1), ((0, 0), (0, cols - v.shape[0])))

    w1 = pad2(w1_oihw[:, :, 0, 0].T * s1[None, :], Cp, Pp).astype(jnp.bfloat16)
    w3 = pad2(w3_oihw[:, :, 0, 0].T * s3[None, :], Pp, C4p).astype(jnp.bfloat16)
    w2_taps = [pad2(w2_oihw[:, :, ky, kx].T * s2[None, :], Pp, Pp)
               for ky in range(3) for kx in range(3)]
    w2 = jnp.concatenate(w2_taps, axis=0).astype(jnp.bfloat16)          # (9*Pp, Pp)
    wfc1 = pad2(fc1_w.T, C4p, midp).astype(jnp.bfloat16)
    wfc2 = pad2(fc2_w.T, midp, C4p).astype(jnp.bfloat16)

    kp = dict(w1=w1, b1=padrow(b1, Pp), w2=w2, b2=padrow(b2, Pp),
              w3=w3, b3=padrow(b3, C4p), wfc1=wfc1, wfc2=wfc2, c4=C4)
    return kp, raw


if __name__ == "__main__":
    # Shapes consistent with the module: SEBottleneck(inplanes=64, planes=16), reduction=16
    # (SE hidden = 4); residual path requires inplanes == planes*4.  N*H*W = 128 rows.
    N, inplanes, planes, reduction = 2, 64, 16, 16
    H = W = 8

    key = jax.random.PRNGKey(0)
    kx, kparam = jax.random.split(key)
    x = jax.random.normal(kx, (N, inplanes, H, W), jnp.float32)   # NCHW like PyTorch

    kp, raw = build_params(kparam, inplanes, planes, reduction)

    out = jax.block_until_ready(se_bottleneck_pallas(x, kp))
    ref = jax.block_until_ready(reference_jax(x, raw))
    np.testing.assert_allclose(np.asarray(out), np.asarray(ref), rtol=2e-2, atol=2e-2)

    print("KERNEL_OK")
</pallas_src>

<mosaic_0001>
module attributes {stable_mosaic.version = 11 : i64} {
  func.func @kernel(%arg0: i32, %arg1: memref<128x128xf32, #tpu.memory_space<vmem>>, %arg2: memref<9x128x1xf32, #tpu.memory_space<vmem>>, %arg3: memref<2x128xf32, #tpu.memory_space<vmem>>, %arg4: memref<128x2xf32, #tpu.memory_space<vmem>>, %arg5: memref<128x128xbf16, #tpu.memory_space<vmem>>, %arg6: memref<1x128xf32, #tpu.memory_space<vmem>>, %arg7: memref<1152x128xbf16, #tpu.memory_space<vmem>>, %arg8: memref<1x128xf32, #tpu.memory_space<vmem>>, %arg9: memref<128x128xbf16, #tpu.memory_space<vmem>>, %arg10: memref<1x128xf32, #tpu.memory_space<vmem>>, %arg11: memref<128x128xbf16, #tpu.memory_space<vmem>>, %arg12: memref<128x128xbf16, #tpu.memory_space<vmem>>, %arg13: memref<128x128xf32, #tpu.memory_space<vmem>>) attributes {dimension_semantics = [#tpu.dimension_semantics<arbitrary>], iteration_bounds = array<i64: 1>, scalar_prefetch = 0 : i64, scratch_operands = 0 : i64, tpu.core_type = #tpu.core_type<tc>, window_params = [{pipeline_mode = #tpu.pipeline_mode<synchronous>, transform_indices = @transform_0, window_bounds = array<i64: 128, 128>}, {pipeline_mode = #tpu.pipeline_mode<synchronous>, transform_indices = @transform_1, window_bounds = array<i64: 9, 128, 1>}, {pipeline_mode = #tpu.pipeline_mode<synchronous>, transform_indices = @transform_2, window_bounds = array<i64: 2, 128>}, {pipeline_mode = #tpu.pipeline_mode<synchronous>, transform_indices = @transform_3, window_bounds = array<i64: 128, 2>}, {pipeline_mode = #tpu.pipeline_mode<synchronous>, transform_indices = @transform_4, window_bounds = array<i64: 128, 128>}, {pipeline_mode = #tpu.pipeline_mode<synchronous>, transform_indices = @transform_5, window_bounds = array<i64: 1, 128>}, {pipeline_mode = #tpu.pipeline_mode<synchronous>, transform_indices = @transform_6, window_bounds = array<i64: 1152, 128>}, {pipeline_mode = #tpu.pipeline_mode<synchronous>, transform_indices = @transform_7, window_bounds = array<i64: 1, 128>}, {pipeline_mode = #tpu.pipeline_mode<synchronous>, transform_indices = @transform_8, window_bounds = array<i64: 128, 128>}, {pipeline_mode = #tpu.pipeline_mode<synchronous>, transform_indices = @transform_9, window_bounds = array<i64: 1, 128>}, {pipeline_mode = #tpu.pipeline_mode<synchronous>, transform_indices = @transform_10, window_bounds = array<i64: 128, 128>}, {pipeline_mode = #tpu.pipeline_mode<synchronous>, transform_indices = @transform_11, window_bounds = array<i64: 128, 128>}, {pipeline_mode = #tpu.pipeline_mode<synchronous>, transform_indices = @transform_12, window_bounds = array<i64: 128, 128>}]} {
    %c0 = arith.constant 0 : index
    %c0_0 = arith.constant 0 : index
    %0 = vector.load %arg1[%c0, %c0_0] : memref<128x128xf32, #tpu.memory_space<vmem>>, vector<128x128xf32>
    %1 = arith.truncf %0 : vector<128x128xf32> to vector<128x128xbf16>
    %c0_1 = arith.constant 0 : index
    %c0_2 = arith.constant 0 : index
    %2 = vector.load %arg5[%c0_1, %c0_2] : memref<128x128xbf16, #tpu.memory_space<vmem>>, vector<128x128xbf16>
    %cst = arith.constant dense<0.000000e+00> : vector<128x128xf32>
    %3 = tpu.matmul %1, %2, %cst {dimension_numbers = #tpu.dot_dimension_numbers<[1], [0], [0], [1], [0, 0, 1, 1], [], []>} : vector<128x128xbf16>, vector<128x128xbf16>, vector<128x128xf32> -> vector<128x128xf32>
    %c0_3 = arith.constant 0 : index
    %c0_4 = arith.constant 0 : index
    %4 = vector.load %arg6[%c0_3, %c0_4] : memref<1x128xf32, #tpu.memory_space<vmem>>, vector<1x128xf32>
    %5 = vector.broadcast %4 : vector<1x128xf32> to vector<128x128xf32>
    %6 = arith.addf %3, %5 : vector<128x128xf32>
    %cst_5 = arith.constant 0.000000e+00 : f32
    %7 = vector.broadcast %cst_5 : f32 to vector<128x128xf32>
    %8 = arith.maximumf %6, %7 : vector<128x128xf32>
    %c9_i32 = arith.constant 9 : i32
    %9 = tpu.dynamic_rotate %8 by %c9_i32 dim 0 : vector<128x128xf32>, i32 -> vector<128x128xf32>
    %c0_6 = arith.constant 0 : index
    %c0_7 = arith.constant 0 : index
    %c0_8 = arith.constant 0 : index
    %10 = vector.load %arg2[%c0_6, %c0_7, %c0_8] : memref<9x128x1xf32, #tpu.memory_space<vmem>>, vector<1x128x1xf32>
    %11 = vector.shape_cast %10 : vector<1x128x1xf32> to vector<128x1xf32>
    %12 = vector.broadcast %11 : vector<128x1xf32> to vector<128x128xf32>
    %13 = arith.mulf %9, %12 : vector<128x128xf32>
    %14 = arith.truncf %13 : vector<128x128xf32> to vector<128x128xbf16>
    %c8_i32 = arith.constant 8 : i32
    %15 = tpu.dynamic_rotate %8 by %c8_i32 dim 0 : vector<128x128xf32>, i32 -> vector<128x128xf32>
    %c1 = arith.constant 1 : index
    %c0_9 = arith.constant 0 : index
    %c0_10 = arith.constant 0 : index
    %16 = vector.load %arg2[%c1, %c0_9, %c0_10] : memref<9x128x1xf32, #tpu.memory_space<vmem>>, vector<1x128x1xf32>
    %17 = vector.shape_cast %16 : vector<1x128x1xf32> to vector<128x1xf32>
    %18 = vector.broadcast %17 : vector<128x1xf32> to vector<128x128xf32>
    %19 = arith.mulf %15, %18 : vector<128x128xf32>
    %20 = arith.truncf %19 : vector<128x128xf32> to vector<128x128xbf16>
    %c7_i32 = arith.constant 7 : i32
    %21 = tpu.dynamic_rotate %8 by %c7_i32 dim 0 : vector<128x128xf32>, i32 -> vector<128x128xf32>
    %c2 = arith.constant 2 : index
    %c0_11 = arith.constant 0 : index
    %c0_12 = arith.constant 0 : index
    %22 = vector.load %arg2[%c2, %c0_11, %c0_12] : memref<9x128x1xf32, #tpu.memory_space<vmem>>, vector<1x128x1xf32>
    %23 = vector.shape_cast %22 : vector<1x128x1xf32> to vector<128x1xf32>
    %24 = vector.broadcast %23 : vector<128x1xf32> to vector<128x128xf32>
    %25 = arith.mulf %21, %24 : vector<128x128xf32>
    %26 = arith.truncf %25 : vector<128x128xf32> to vector<128x128xbf16>
    %c1_i32 = arith.constant 1 : i32
    %27 = tpu.dynamic_rotate %8 by %c1_i32 dim 0 : vector<128x128xf32>, i32 -> vector<128x128xf32>
    %c3 = arith.constant 3 : index
    %c0_13 = arith.constant 0 : index
    %c0_14 = arith.constant 0 : index
    %28 = vector.load %arg2[%c3, %c0_13, %c0_14] : memref<9x128x1xf32, #tpu.memory_space<vmem>>, vector<1x128x1xf32>
    %29 = vector.shape_cast %28 : vector<1x128x1xf32> to vector<128x1xf32>
    %30 = vector.broadcast %29 : vector<128x1xf32> to vector<128x128xf32>
    %31 = arith.mulf %27, %30 : vector<128x128xf32>
    %32 = arith.truncf %31 : vector<128x128xf32> to vector<128x128xbf16>
    %c4 = arith.constant 4 : index
    %c0_15 = arith.constant 0 : index
    %c0_16 = arith.constant 0 : index
    %33 = vector.load %arg2[%c4, %c0_15, %c0_16] : memref<9x128x1xf32, #tpu.memory_space<vmem>>, vector<1x128x1xf32>
    %34 = vector.shape_cast %33 : vector<1x128x1xf32> to vector<128x1xf32>
    %35 = vector.broadcast %34 : vector<128x1xf32> to vector<128x128xf32>
    %36 = arith.mulf %8, %35 : vector<128x128xf32>
    %37 = arith.truncf %36 : vector<128x128xf32> to vector<128x128xbf16>
    %c127_i32 = arith.constant 127 : i32
    %38 = tpu.dynamic_rotate %8 by %c127_i32 dim 0 : vector<128x128xf32>, i32 -> vector<128x128xf32>
    %c5 = arith.constant 5 : index
    %c0_17 = arith.constant 0 : index
    %c0_18 = arith.constant 0 : index
    %39 = vector.load %arg2[%c5, %c0_17, %c0_18] : memref<9x128x1xf32, #tpu.memory_space<vmem>>, vector<1x128x1xf32>
    %40 = vector.shape_cast %39 : vector<1x128x1xf32> to vector<128x1xf32>
    %41 = vector.broadcast %40 : vector<128x1xf32> to vector<128x128xf32>
    %42 = arith.mulf %38, %41 : vector<128x128xf32>
    %43 = arith.truncf %42 : vector<128x128xf32> to vector<128x128xbf16>
    %c121_i32 = arith.constant 121 : i32
    %44 = tpu.dynamic_rotate %8 by %c121_i32 dim 0 : vector<128x128xf32>, i32 -> vector<128x128xf32>
    %c6 = arith.constant 6 : index
    %c0_19 = arith.constant 0 : index
    %c0_20 = arith.constant 0 : index
    %45 = vector.load %arg2[%c6, %c0_19, %c0_20] : memref<9x128x1xf32, #tpu.memory_space<vmem>>, vector<1x128x1xf32>
    %46 = vector.shape_cast %45 : vector<1x128x1xf32> to vector<128x1xf32>
    %47 = vector.broadcast %46 : vector<128x1xf32> to vector<128x128xf32>
    %48 = arith.mulf %44, %47 : vector<128x128xf32>
    %49 = arith.truncf %48 : vector<128x128xf32> to vector<128x128xbf16>
    %c120_i32 = arith.constant 120 : i32
    %50 = tpu.dynamic_rotate %8 by %c120_i32 dim 0 : vector<128x128xf32>, i32 -> vector<128x128xf32>
    %c7 = arith.constant 7 : index
    %c0_21 = arith.constant 0 : index
    %c0_22 = arith.constant 0 : index
    %51 = vector.load %arg2[%c7, %c0_21, %c0_22] : memref<9x128x1xf32, #tpu.memory_space<vmem>>, vector<1x128x1xf32>
    %52 = vector.shape_cast %51 : vector<1x128x1xf32> to vector<128x1xf32>
    %53 = vector.broadcast %52 : vector<128x1xf32> to vector<128x128xf32>
    %54 = arith.mulf %50, %53 : vector<128x128xf32>
    %55 = arith.truncf %54 : vector<128x128xf32> to vector<128x128xbf16>
    %c119_i32 = arith.constant 119 : i32
    %56 = tpu.dynamic_rotate %8 by %c119_i32 dim 0 : vector<128x128xf32>, i32 -> vector<128x128xf32>
    %c8 = arith.constant 8 : index
    %c0_23 = arith.constant 0 : index
    %c0_24 = arith.constant 0 : index
    %57 = vector.load %arg2[%c8, %c0_23, %c0_24] : memref<9x128x1xf32, #tpu.memory_space<vmem>>, vector<1x128x1xf32>
    %58 = vector.shape_cast %57 : vector<1x128x1xf32> to vector<128x1xf32>
    %59 = vector.broadcast %58 : vector<128x1xf32> to vector<128x128xf32>
    %60 = arith.mulf %56, %59 : vector<128x128xf32>
    %61 = arith.truncf %60 : vector<128x128xf32> to vector<128x128xbf16>
    %62 = tpu.concatenate %14, %20, %26, %32, %37, %43, %49, %55, %61 in 1 : vector<128x128xbf16>, vector<128x128xbf16>, vector<128x128xbf16>, vector<128x128xbf16>, vector<128x128xbf16>, vector<128x128xbf16>, vector<128x128xbf16>, vector<128x128xbf16>, vector<128x128xbf16> -> vector<128x1152xbf16>
    %c0_25 = arith.constant 0 : index
    %c0_26 = arith.constant 0 : index
    %63 = vector.load %arg7[%c0_25, %c0_26] : memref<1152x128xbf16, #tpu.memory_space<vmem>>, vector<1152x128xbf16>
    %cst_27 = arith.constant dense<0.000000e+00> : vector<128x128xf32>
    %64 = tpu.matmul %62, %63, %cst_27 {dimension_numbers = #tpu.dot_dimension_numbers<[1], [0], [0], [1], [0, 0, 1, 1], [], []>} : vector<128x1152xbf16>, vector<1152x128xbf16>, vector<128x128xf32> -> vector<128x128xf32>
    %c0_28 = arith.constant 0 : index
    %c0_29 = arith.constant 0 : index
    %65 = vector.load %arg8[%c0_28, %c0_29] : memref<1x128xf32, #tpu.memory_space<vmem>>, vector<1x128xf32>
    %66 = vector.broadcast %65 : vector<1x128xf32> to vector<128x128xf32>
    %67 = arith.addf %64, %66 : vector<128x128xf32>
    %cst_30 = arith.constant 0.000000e+00 : f32
    %68 = vector.broadcast %cst_30 : f32 to vector<128x128xf32>
    %69 = arith.maximumf %67, %68 : vector<128x128xf32>
    %70 = arith.truncf %69 : vector<128x128xf32> to vector<128x128xbf16>
    %c0_31 = arith.constant 0 : index
    %c0_32 = arith.constant 0 : index
    %71 = vector.load %arg9[%c0_31, %c0_32] : memref<128x128xbf16, #tpu.memory_space<vmem>>, vector<128x128xbf16>
    %cst_33 = arith.constant dense<0.000000e+00> : vector<128x128xf32>
    %72 = tpu.matmul %70, %71, %cst_33 {dimension_numbers = #tpu.dot_dimension_numbers<[1], [0], [0], [1], [0, 0, 1, 1], [], []>} : vector<128x128xbf16>, vector<128x128xbf16>, vector<128x128xf32> -> vector<128x128xf32>
    %c0_34 = arith.constant 0 : index
    %c0_35 = arith.constant 0 : index
    %73 = vector.load %arg10[%c0_34, %c0_35] : memref<1x128xf32, #tpu.memory_space<vmem>>, vector<1x128xf32>
    %74 = vector.broadcast %73 : vector<1x128xf32> to vector<128x128xf32>
    %75 = arith.addf %72, %74 : vector<128x128xf32>
    %c0_36 = arith.constant 0 : index
    %c0_37 = arith.constant 0 : index
    %76 = vector.load %arg3[%c0_36, %c0_37] : memref<2x128xf32, #tpu.memory_space<vmem>>, vector<2x128xf32>
    %cst_38 = arith.constant dense<0.000000e+00> : vector<2x128xf32>
    %77 = tpu.matmul %76, %75, %cst_38 {dimension_numbers = #tpu.dot_dimension_numbers<[1], [0], [0], [1], [0, 0, 1, 1], [], []>} : vector<2x128xf32>, vector<128x128xf32>, vector<2x128xf32> -> vector<2x128xf32>
    %78 = arith.truncf %77 : vector<2x128xf32> to vector<2x128xbf16>
    %c0_39 = arith.constant 0 : index
    %c0_40 = arith.constant 0 : index
    %79 = vector.load %arg11[%c0_39, %c0_40] : memref<128x128xbf16, #tpu.memory_space<vmem>>, vector<128x128xbf16>
    %cst_41 = arith.constant dense<0.000000e+00> : vector<2x128xf32>
    %80 = tpu.matmul %78, %79, %cst_41 {dimension_numbers = #tpu.dot_dimension_numbers<[1], [0], [0], [1], [0, 0, 1, 1], [], []>} : vector<2x128xbf16>, vector<128x128xbf16>, vector<2x128xf32> -> vector<2x128xf32>
    %cst_42 = arith.constant 0.000000e+00 : f32
    %81 = vector.broadcast %cst_42 : f32 to vector<2x128xf32>
    %82 = arith.maximumf %80, %81 : vector<2x128xf32>
    %83 = arith.truncf %82 : vector<2x128xf32> to vector<2x128xbf16>
    %c0_43 = arith.constant 0 : index
    %c0_44 = arith.constant 0 : index
    %84 = vector.load %arg12[%c0_43, %c0_44] : memref<128x128xbf16, #tpu.memory_space<vmem>>, vector<128x128xbf16>
    %cst_45 = arith.constant dense<0.000000e+00> : vector<2x128xf32>
    %85 = tpu.matmul %83, %84, %cst_45 {dimension_numbers = #tpu.dot_dimension_numbers<[1], [0], [0], [1], [0, 0, 1, 1], [], []>} : vector<2x128xbf16>, vector<128x128xbf16>, vector<2x128xf32> -> vector<2x128xf32>
    %86 = arith.negf %85 : vector<2x128xf32>
    %87 = math.exp %86 : vector<2x128xf32>
    %cst_46 = arith.constant 1.000000e+00 : f32
    %88 = vector.broadcast %cst_46 : f32 to vector<2x128xf32>
    %89 = arith.addf %88, %87 : vector<2x128xf32>
    %90 = arith.divf %88, %89 : vector<2x128xf32>
    %c0_47 = arith.constant 0 : index
    %c0_48 = arith.constant 0 : index
    %91 = vector.load %arg4[%c0_47, %c0_48] : memref<128x2xf32, #tpu.memory_space<vmem>>, vector<128x2xf32>
    %cst_49 = arith.constant dense<0.000000e+00> : vector<128x128xf32>
    %92 = tpu.matmul %91, %90, %cst_49 {dimension_numbers = #tpu.dot_dimension_numbers<[1], [0], [0], [1], [0, 0, 1, 1], [], []>} : vector<128x2xf32>, vector<2x128xf32>, vector<128x128xf32> -> vector<128x128xf32>
    %93 = arith.mulf %75, %92 : vector<128x128xf32>
    %94 = arith.addf %93, %0 : vector<128x128xf32>
    %c0_50 = arith.constant 0 : index
    %c0_51 = arith.constant 0 : index
    %95 = vector.load %arg13[%c0_50, %c0_51] : memref<128x128xf32, #tpu.memory_space<vmem>>, vector<128x128xf32>
    tpu.vector_store %arg13[%c0_50, %c0_51], %94 {strides = array<i32>} : memref<128x128xf32, #tpu.memory_space<vmem>>, vector<128x128xf32>,
    return
  }
  func.func @transform_0(%arg0: i32) -> (i32, i32) {
    %c0_i32 = arith.constant 0 : i32
    %c0_i32_0 = arith.constant 0 : i32
    %c0_i32_1 = arith.constant 0 : i32
    return %c0_i32, %c0_i32_0 : i32, i32
  }
  func.func @transform_1(%arg0: i32) -> (i32, i32, i32) {
    %c0_i32 = arith.constant 0 : i32
    %c0_i32_0 = arith.constant 0 : i32
    %c0_i32_1 = arith.constant 0 : i32
    %c0_i32_2 = arith.constant 0 : i32
    return %c0_i32, %c0_i32_0, %c0_i32_1 : i32, i32, i32
  }
  func.func @transform_2(%arg0: i32) -> (i32, i32) {
    %c0_i32 = arith.constant 0 : i32
    %c0_i32_0 = arith.constant 0 : i32
    %c0_i32_1 = arith.constant 0 : i32
    return %c0_i32, %c0_i32_0 : i32, i32
  }
  func.func @transform_3(%arg0: i32) -> (i32, i32) {
    %c0_i32 = arith.constant 0 : i32
    %c0_i32_0 = arith.constant 0 : i32
    %c0_i32_1 = arith.constant 0 : i32
    return %c0_i32, %c0_i32_0 : i32, i32
  }
  func.func @transform_4(%arg0: i32) -> (i32, i32) {
    %c0_i32 = arith.constant 0 : i32
    %c0_i32_0 = arith.constant 0 : i32
    %c0_i32_1 = arith.constant 0 : i32
    return %c0_i32, %c0_i32_0 : i32, i32
  }
  func.func @transform_5(%arg0: i32) -> (i32, i32) {
    %c0_i32 = arith.constant 0 : i32
    %c0_i32_0 = arith.constant 0 : i32
    %c0_i32_1 = arith.constant 0 : i32
    return %c0_i32, %c0_i32_0 : i32, i32
  }
  func.func @transform_6(%arg0: i32) -> (i32, i32) {
    %c0_i32 = arith.constant 0 : i32
    %c0_i32_0 = arith.constant 0 : i32
    %c0_i32_1 = arith.constant 0 : i32
    return %c0_i32, %c0_i32_0 : i32, i32
  }
  func.func @transform_7(%arg0: i32) -> (i32, i32) {
    %c0_i32 = arith.constant 0 : i32
    %c0_i32_0 = arith.constant 0 : i32
    %c0_i32_1 = arith.constant 0 : i32
    return %c0_i32, %c0_i32_0 : i32, i32
  }
  func.func @transform_8(%arg0: i32) -> (i32, i32) {
    %c0_i32 = arith.constant 0 : i32
    %c0_i32_0 = arith.constant 0 : i32
    %c0_i32_1 = arith.constant 0 : i32
    return %c0_i32, %c0_i32_0 : i32, i32
  }
  func.func @transform_9(%arg0: i32) -> (i32, i32) {
    %c0_i32 = arith.constant 0 : i32
    %c0_i32_0 = arith.constant 0 : i32
    %c0_i32_1 = arith.constant 0 : i32
    return %c0_i32, %c0_i32_0 : i32, i32
  }
  func.func @transform_10(%arg0: i32) -> (i32, i32) {
    %c0_i32 = arith.constant 0 : i32
    %c0_i32_0 = arith.constant 0 : i32
    %c0_i32_1 = arith.constant 0 : i32
    return %c0_i32, %c0_i32_0 : i32, i32
  }
  func.func @transform_11(%arg0: i32) -> (i32, i32) {
    %c0_i32 = arith.constant 0 : i32
    %c0_i32_0 = arith.constant 0 : i32
    %c0_i32_1 = arith.constant 0 : i32
    return %c0_i32, %c0_i32_0 : i32, i32
  }
  func.func @transform_12(%arg0: i32) -> (i32, i32) {
    %c0_i32 = arith.constant 0 : i32
    %c0_i32_0 = arith.constant 0 : i32
    %c0_i32_1 = arith.constant 0 : i32
    return %c0_i32, %c0_i32_0 : i32, i32
  }
}

</mosaic_0001>

<llo_original>
// kernel: tpu_custom_call.1
$region0: #{tpu_custom_call.1}
  #allocation0 [shape = 'u32[]', space=smem, size = 0x4, offset = 0x4, fixed_abs, tag = 'smem constant byte address 0x4 - core index']
  #allocation1 [shape = 'u32[144,128]{1,0:T(1,128)}', space=vmem, size = 0x12000, scoped, tag = 'internal scratch']
  %s0 = inlined_call_operand.vmem [shape: f32[128,128], index: 0, kind: input, shape index: {}]
  %s1 = inlined_call_operand.vmem [shape: f32[9,128,1], index: 1, kind: input, shape index: {}]
  %s2 = inlined_call_operand.vmem [shape: f32[2,128], index: 2, kind: input, shape index: {}]
  %s3 = inlined_call_operand.vmem [shape: f32[128,2], index: 3, kind: input, shape index: {}]
  %s4 = inlined_call_operand.vmem [shape: bf16[128,128], index: 4, kind: input, shape index: {}]
  %s5 = inlined_call_operand.vmem [shape: f32[1,128], index: 5, kind: input, shape index: {}]
  %s6 = inlined_call_operand.vmem [shape: bf16[1152,128], index: 6, kind: input, shape index: {}]
  %s7 = inlined_call_operand.vmem [shape: f32[1,128], index: 7, kind: input, shape index: {}]
  %s8 = inlined_call_operand.vmem [shape: bf16[128,128], index: 8, kind: input, shape index: {}]
  %s9 = inlined_call_operand.vmem [shape: f32[1,128], index: 9, kind: input, shape index: {}]
  %s10 = inlined_call_operand.vmem [shape: bf16[128,128], index: 10, kind: input, shape index: {}]
  %s11 = inlined_call_operand.vmem [shape: bf16[128,128], index: 11, kind: input, shape index: {}]
  %s12 = inlined_call_operand.hbm [shape: f32[128,128], index: 12, kind: output, shape index: {}]
  %s13 = sld [smem:[#allocation0]]
  $region58: #{tpu_custom_call.1} parent=0
    _
  %s15 = ssub.s32 1, %s13
  %s16 = scalar_select 0, %s15, %s13
  $region1: #{tpu_custom_call.1} parent=0
    #allocation2 [shape = 'u8[65536]{0}', space=vmem, size = 0x10000, scoped, tag = 'output window, operand 0, single buffered']
    #allocation3 [shape = 's32[1]{0}', space=sflag, size = 0x4, scoped, tag = 'scoped memory for tpu_custom_call.1']
    %17 = vsyncpa [#allocation3], 0
    // Predicated region
    $region2: #{tpu_custom_call.1} parent=1 // pred_check
      _
    $region3: #{tpu_custom_call.1} parent=1 // pred_check_branch
      %19 = sbr.rel (0) target = $region5
    $region4: #{tpu_custom_call.1} parent=1 // pred_region
      _
    $region5: #{tpu_custom_call.1} parent=1 // pred_fallthru
      _
    // Predicated region
    $region6: #{tpu_custom_call.1} parent=1 // pred_check
      _
    $region7: #{tpu_custom_call.1} parent=1 // pred_check_branch
      %21 = sbr.rel (0) target = $region9
    $region8: #{tpu_custom_call.1} parent=1 // pred_region
      _
    $region9: #{tpu_custom_call.1} parent=1 // pred_fallthru
      _
    // Predicated region
    $region10: #{tpu_custom_call.1} parent=1 // pred_check
      _
    $region11: #{tpu_custom_call.1} parent=1 // pred_check_branch
      %23 = sbr.rel (0) target = $region13
    $region12: #{tpu_custom_call.1} parent=1 // pred_region
      _
    $region13: #{tpu_custom_call.1} parent=1 // pred_fallthru
      _
    // Predicated region
    $region14: #{tpu_custom_call.1} parent=1 // pred_check
      _
    $region15: #{tpu_custom_call.1} parent=1 // pred_check_branch
      %25 = sbr.rel (0) target = $region17
    $region16: #{tpu_custom_call.1} parent=1 // pred_region
      _
    $region17: #{tpu_custom_call.1} parent=1 // pred_fallthru
      _
    // Predicated region
    $region18: #{tpu_custom_call.1} parent=1 // pred_check
      _
    $region19: #{tpu_custom_call.1} parent=1 // pred_check_branch
      %27 = sbr.rel (0) target = $region21
    $region20: #{tpu_custom_call.1} parent=1 // pred_region
      _
    $region21: #{tpu_custom_call.1} parent=1 // pred_fallthru
      _
    // Predicated region
    $region22: #{tpu_custom_call.1} parent=1 // pred_check
      _
    $region23: #{tpu_custom_call.1} parent=1 // pred_check_branch
      %29 = sbr.rel (0) target = $region25
    $region24: #{tpu_custom_call.1} parent=1 // pred_region
      _
    $region25: #{tpu_custom_call.1} parent=1 // pred_fallthru
      _
    // Predicated region
    $region26: #{tpu_custom_call.1} parent=1 // pred_check
      _
    $region27: #{tpu_custom_call.1} parent=1 // pred_check_branch
      %31 = sbr.rel (0) target = $region29
    $region28: #{tpu_custom_call.1} parent=1 // pred_region
      _
    $region29: #{tpu_custom_call.1} parent=1 // pred_fallthru
      _
    // Predicated region
    $region30: #{tpu_custom_call.1} parent=1 // pred_check
      _
    $region31: #{tpu_custom_call.1} parent=1 // pred_check_branch
      %33 = sbr.rel (0) target = $region33
    $region32: #{tpu_custom_call.1} parent=1 // pred_region
      _
    $region33: #{tpu_custom_call.1} parent=1 // pred_fallthru
      _
    // Predicated region
    $region34: #{tpu_custom_call.1} parent=1 // pred_check
      _
    $region35: #{tpu_custom_call.1} parent=1 // pred_check_branch
      %35 = sbr.rel (0) target = $region37
    $region36: #{tpu_custom_call.1} parent=1 // pred_region
      _
    $region37: #{tpu_custom_call.1} parent=1 // pred_fallthru
      _
    // Predicated region
    $region38: #{tpu_custom_call.1} parent=1 // pred_check
      _
    $region39: #{tpu_custom_call.1} parent=1 // pred_check_branch
      %37 = sbr.rel (0) target = $region41
    $region40: #{tpu_custom_call.1} parent=1 // pred_region
      _
    $region41: #{tpu_custom_call.1} parent=1 // pred_fallthru
      _
    // Predicated region
    $region42: #{tpu_custom_call.1} parent=1 // pred_check
      _
    $region43: #{tpu_custom_call.1} parent=1 // pred_check_branch
      %39 = sbr.rel (0) target = $region45
    $region44: #{tpu_custom_call.1} parent=1 // pred_region
      _
    $region45: #{tpu_custom_call.1} parent=1 // pred_fallthru
      _
    // Predicated region
    $region46: #{tpu_custom_call.1} parent=1 // pred_check
      _
    $region47: #{tpu_custom_call.1} parent=1 // pred_check_branch
      %41 = sbr.rel (0) target = $region49
    $region48: #{tpu_custom_call.1} parent=1 // pred_region
      _
    $region49: #{tpu_custom_call.1} parent=1 // pred_fallthru
      _
    %v43 = vld [vmem:[%s0] sm:$0xff]
    %v44 = vld [vmem:[%s0 + $0x8] sm:$0xff]
    %v45 = vld [vmem:[%s0 + $0x10] sm:$0xff]
    %v46 = vld [vmem:[%s0 + $0x18] sm:$0xff]
    %v47 = vld [vmem:[%s0 + $0x20] sm:$0xff]
    %v48 = vld [vmem:[%s0 + $0x28] sm:$0xff]
    %v49 = vld [vmem:[%s0 + $0x30] sm:$0xff]
    %v50 = vld [vmem:[%s0 + $0x38] sm:$0xff]
    %v51 = vld [vmem:[%s0 + $0x40] sm:$0xff]
    %v52 = vld [vmem:[%s0 + $0x48] sm:$0xff]
    %v53 = vld [vmem:[%s0 + $0x50] sm:$0xff]
    %v54 = vld [vmem:[%s0 + $0x58] sm:$0xff]
    %v55 = vld [vmem:[%s0 + $0x60] sm:$0xff]
    %v56 = vld [vmem:[%s0 + $0x68] sm:$0xff]
    %v57 = vld [vmem:[%s0 + $0x70] sm:$0xff]
    %v58 = vld [vmem:[%s0 + $0x78] sm:$0xff]
    %v59 = vpack.c.bf16 %v44, %v43
    %v60 = vpack.c.bf16 %v46, %v45
    %v61 = vpack.c.bf16 %v48, %v47
    %v62 = vpack.c.bf16 %v50, %v49
    %v63 = vpack.c.bf16 %v52, %v51
    %v64 = vpack.c.bf16 %v54, %v53
    %v65 = vpack.c.bf16 %v56, %v55
    %v66 = vpack.c.bf16 %v58, %v57
    %v67 = vld [vmem:[%s4] sm:$0xf]
    %v68 = vld [vmem:[%s4 + $0x4] sm:$0xf]
    %v69 = vld [vmem:[%s4 + $0x8] sm:$0xf]
    %v70 = vld [vmem:[%s4 + $0xc] sm:$0xf]
    %v71 = vld [vmem:[%s4 + $0x10] sm:$0xf]
    %v72 = vld [vmem:[%s4 + $0x14] sm:$0xf]
    %v73 = vld [vmem:[%s4 + $0x18] sm:$0xf]
    %v74 = vld [vmem:[%s4 + $0x1c] sm:$0xf]
    %v75 = vld [vmem:[%s4 + $0x20] sm:$0xf]
    %v76 = vld [vmem:[%s4 + $0x24] sm:$0xf]
    %v77 = vld [vmem:[%s4 + $0x28] sm:$0xf]
    %v78 = vld [vmem:[%s4 + $0x2c] sm:$0xf]
    %v79 = vld [vmem:[%s4 + $0x30] sm:$0xf]
    %v80 = vld [vmem:[%s4 + $0x34] sm:$0xf]
    %v81 = vld [vmem:[%s4 + $0x38] sm:$0xf]
    %v82 = vld [vmem:[%s4 + $0x3c] sm:$0xf]
    %v83 = vld [vmem:[%s5] sm:$0x1]
    %v85 = vlaneseq
    %v86 = vshrl.u32 %v85, 7
    %v87 = vsub.s32 0, %v86
    %v88 = vrot.slane %v83, %v87
    %v106 = vunpack.c.l.b16 %v67
    %v107 = vunpack.c.l.b16 %v68
    %v108 = vunpack.c.l.b16 %v69
    %v109 = vunpack.c.l.b16 %v70
    %v110 = vunpack.c.l.b16 %v71
    %v111 = vunpack.c.l.b16 %v72
    %v112 = vunpack.c.l.b16 %v73
    %v113 = vunpack.c.l.b16 %v74
    %v114 = vunpack.c.l.b16 %v75
    %v115 = vunpack.c.l.b16 %v76
    %v116 = vunpack.c.l.b16 %v77
    %v117 = vunpack.c.l.b16 %v78
    %v118 = vunpack.c.l.b16 %v79
    %v119 = vunpack.c.l.b16 %v80
    %v120 = vunpack.c.l.b16 %v81
    %v121 = vunpack.c.l.b16 %v82
    %v122 = vpack.c.b16 %v107, %v106
    %v123 = vpack.c.b16 %v109, %v108
    %v124 = vpack.c.b16 %v111, %v110
    %v125 = vpack.c.b16 %v113, %v112
    %v126 = vpack.c.b16 %v115, %v114
    %v127 = vpack.c.b16 %v117, %v116
    %v128 = vpack.c.b16 %v119, %v118
    %v129 = vpack.c.b16 %v121, %v120
    %138 = vmatprep.subr.bf16.mxu0 0
    %139 = vmatpush1.bf16.msra.mxu0 %v129
    %140 = vmatprep.subr.bf16.mxu0 0
    %141 = vmatpush1.bf16.msra.mxu0 %v128
    %142 = vmatprep.subr.bf16.mxu0 0
    %143 = vmatpush1.bf16.msra.mxu0 %v127
    %144 = vmatprep.subr.bf16.mxu0 0
    %145 = vmatpush1.bf16.msra.mxu0 %v126
    %146 = vmatprep.subr.bf16.mxu0 0
    %147 = vmatpush1.bf16.msra.mxu0 %v125
    %148 = vmatprep.subr.bf16.mxu0 0
    %149 = vmatpush1.bf16.msra.mxu0 %v124
    %150 = vmatprep.subr.bf16.mxu0 0
    %151 = vmatpush1.bf16.msra.mxu0 %v123
    %152 = vmatprep.subr.bf16.mxu0 0
    %153 = vmatpush1.bf16.msra.mxu0 %v122
    %154 = vmatprep.subr.bf16.mxu0 0
    %155 = vmatpush2.bf16.msra.mxu0 0
    %156 = vmatprep.subr.bf16.mxu0 0
    %157 = vmatpush2.bf16.msra.mxu0 0
    %158 = vmatprep.subr.bf16.mxu0 0
    %159 = vmatpush2.bf16.msra.mxu0 0
    %160 = vmatprep.subr.bf16.mxu0 0
    %161 = vmatpush2.bf16.msra.mxu0 0
    %162 = vmatprep.subr.bf16.mxu0 0
    %163 = vmatpush2.bf16.msra.mxu0 0
    %164 = vmatprep.subr.bf16.mxu0 0
    %165 = vmatpush2.bf16.msra.mxu0 0
    %166 = vmatprep.subr.bf16.mxu0 0
    %167 = vmatpush2.bf16.msra.mxu0 0
    %168 = vmatprep.subr.bf16.mxu0 0
    %169 = vmatpush2.bf16.msra.mxu0 0
    %170 = vmatprep.mubr.bf16.mxu0 0
    %171 = vmatmul.mubr.bf16.gmra.mxu0 %v59
    %v172 = vpop.f32.mrf.mxu0
    %v173 = vadd.f32 %v88, %v172
    %v174 = vpop.f32.mrf.mxu0
    %v175 = vpop.f32.mrf.mxu0
    %v176 = vadd.f32 %v88, %v175
    %v177 = vpop.f32.mrf.mxu0
    %178 = vmatprep.mubr.bf16.mxu0 0
    %179 = vmatmul.mubr.bf16.gmra.mxu0 %v60
    %v180 = vpop.f32.mrf.mxu0
    %v181 = vadd.f32 %v88, %v180
    %v182 = vpop.f32.mrf.mxu0
    %v183 = vpop.f32.mrf.mxu0
    %v184 = vadd.f32 %v88, %v183
    %v185 = vpop.f32.mrf.mxu0
    %186 = vmatprep.mubr.bf16.mxu0 0
    %187 = vmatmul.mubr.bf16.gmra.mxu0 %v61
    %v188 = vpop.f32.mrf.mxu0
    %v189 = vadd.f32 %v88, %v188
    %v190 = vpop.f32.mrf.mxu0
    %v191 = vpop.f32.mrf.mxu0
    %v192 = vadd.f32 %v88, %v191
    %v193 = vpop.f32.mrf.mxu0
    %194 = vmatprep.mubr.bf16.mxu0 0
    %195 = vmatmul.mubr.bf16.gmra.mxu0 %v62
    %v196 = vpop.f32.mrf.mxu0
    %v197 = vadd.f32 %v88, %v196
    %v198 = vpop.f32.mrf.mxu0
    %v199 = vpop.f32.mrf.mxu0
    %v200 = vadd.f32 %v88, %v199
    %v201 = vpop.f32.mrf.mxu0
    %202 = vmatprep.mubr.bf16.mxu0 0
    %203 = vmatmul.mubr.bf16.gmra.mxu0 %v63
    %v204 = vpop.f32.mrf.mxu0
    %v205 = vadd.f32 %v88, %v204
    %v206 = vpop.f32.mrf.mxu0
    %v207 = vpop.f32.mrf.mxu0
    %v208 = vadd.f32 %v88, %v207
    %v209 = vpop.f32.mrf.mxu0
    %210 = vmatprep.mubr.bf16.mxu0 0
    %211 = vmatmul.mubr.bf16.gmra.mxu0 %v64
    %v212 = vpop.f32.mrf.mxu0
    %v213 = vadd.f32 %v88, %v212
    %v214 = vpop.f32.mrf.mxu0
    %v215 = vpop.f32.mrf.mxu0
    %v216 = vadd.f32 %v88, %v215
    %v217 = vpop.f32.mrf.mxu0
    %218 = vmatprep.mubr.bf16.mxu0 0
    %219 = vmatmul.mubr.bf16.gmra.mxu0 %v65
    %v220 = vpop.f32.mrf.mxu0
    %v221 = vadd.f32 %v88, %v220
    %v222 = vpop.f32.mrf.mxu0
    %v223 = vpop.f32.mrf.mxu0
    %v224 = vadd.f32 %v88, %v223
    %v225 = vpop.f32.mrf.mxu0
    %226 = vmatprep.mubr.bf16.mxu0 0
    %227 = vmatmul.mubr.bf16.gmra.mxu0 %v66
    %v228 = vpop.f32.mrf.mxu0
    %v229 = vadd.f32 %v88, %v228
    %v230 = vpop.f32.mrf.mxu0
    %v231 = vpop.f32.mrf.mxu0
    %v232 = vadd.f32 %v88, %v231
    %v233 = vpop.f32.mrf.mxu0
    %234 = vdwg.mxu0
    %v235 = vmax.f32 %v173, 0.0
    %v236 = vmax.f32 %v176, 0.0
    %v237 = vmax.f32 %v181, 0.0
    %v238 = vmax.f32 %v184, 0.0
    %v239 = vmax.f32 %v189, 0.0
    %v240 = vmax.f32 %v192, 0.0
    %v241 = vmax.f32 %v197, 0.0
    %v242 = vmax.f32 %v200, 0.0
    %v243 = vmax.f32 %v205, 0.0
    %v244 = vmax.f32 %v208, 0.0
    %v245 = vmax.f32 %v213, 0.0
    %v246 = vmax.f32 %v216, 0.0
    %v247 = vmax.f32 %v221, 0.0
    %v248 = vmax.f32 %v224, 0.0
    %v249 = vmax.f32 %v229, 0.0
    %v250 = vmax.f32 %v232, 0.0
    %v251 = vrot.slane %v235, 7
    %v252 = vrot.slane %v236, 7
    %v253 = vrot.slane %v237, 7
    %v254 = vrot.slane %v238, 7
    %v255 = vrot.slane %v239, 7
    %v256 = vrot.slane %v240, 7
    %v257 = vrot.slane %v241, 7
    %v258 = vrot.slane %v242, 7
    %v259 = vrot.slane %v243, 7
    %v260 = vrot.slane %v244, 7
    %v261 = vrot.slane %v245, 7
    %v262 = vrot.slane %v246, 7
    %v263 = vrot.slane %v247, 7
    %v264 = vrot.slane %v248, 7
    %v265 = vrot.slane %v249, 7
    %v266 = vrot.slane %v250, 7
    %v267 = vlaneseq
    %v268 = vshrl.u32 %v267, 7
    %vm269 = vcmp.lt.s32.totalorder %v268, 1
    %v270 = vsel %vm269, %v265, %v266
    %v271 = vsel %vm269, %v264, %v265
    %v272 = vsel %vm269, %v263, %v264
    %v273 = vsel %vm269, %v262, %v263
    %v274 = vsel %vm269, %v261, %v262
    %v275 = vsel %vm269, %v260, %v261
    %v276 = vsel %vm269, %v259, %v260
    %v277 = vsel %vm269, %v258, %v259
    %v278 = vsel %vm269, %v257, %v258
    %v279 = vsel %vm269, %v256, %v257
    %v280 = vsel %vm269, %v255, %v256
    %v281 = vsel %vm269, %v254, %v255
    %v282 = vsel %vm269, %v253, %v254
    %v283 = vsel %vm269, %v252, %v253
    %v284 = vsel %vm269, %v251, %v252
    %v285 = vsel %vm269, %v266, %v251
    %v286 = vld [vmem:[%s1] sm:$0xff]
    %v287 = vld [vmem:[%s1 + $0x8] sm:$0xff]
    %v288 = vld [vmem:[%s1 + $0x10] sm:$0xff]
    %v289 = vld [vmem:[%s1 + $0x18] sm:$0xff]
    %v290 = vld [vmem:[%s1 + $0x20] sm:$0xff]
    %v291 = vld [vmem:[%s1 + $0x28] sm:$0xff]
    %v292 = vld [vmem:[%s1 + $0x30] sm:$0xff]
    %v293 = vld [vmem:[%s1 + $0x38] sm:$0xff]
    %v294 = vld [vmem:[%s1 + $0x40] sm:$0xff]
    %v295 = vld [vmem:[%s1 + $0x48] sm:$0xff]
    %v296 = vld [vmem:[%s1 + $0x50] sm:$0xff]
    %v297 = vld [vmem:[%s1 + $0x58] sm:$0xff]
    %v298 = vld [vmem:[%s1 + $0x60] sm:$0xff]
    %v299 = vld [vmem:[%s1 + $0x68] sm:$0xff]
    %v300 = vld [vmem:[%s1 + $0x70] sm:$0xff]
    %v301 = vld [vmem:[%s1 + $0x78] sm:$0xff]
    %303 = vset.pattern.permute.xlu0 0
    %304 = vperm.xlu0 %303, %v286
    %v305 = vpop.permute.xlu0 %304
    %308 = vset.pattern.permute.xlu0 0
    %309 = vperm.xlu0 %308, %v287
    %v310 = vpop.permute.xlu0 %309
    %313 = vset.pattern.permute.xlu0 0
    %314 = vperm.xlu0 %313, %v288
    %v315 = vpop.permute.xlu0 %314
    %318 = vset.pattern.permute.xlu0 0
    %319 = vperm.xlu0 %318, %v289
    %v320 = vpop.permute.xlu0 %319
    %323 = vset.pattern.permute.xlu0 0
    %324 = vperm.xlu0 %323, %v290
    %v325 = vpop.permute.xlu0 %324
    %328 = vset.pattern.permute.xlu0 0
    %329 = vperm.xlu0 %328, %v291
    %v330 = vpop.permute.xlu0 %329
    %333 = vset.pattern.permute.xlu0 0
    %334 = vperm.xlu0 %333, %v292
    %v335 = vpop.permute.xlu0 %334
    %338 = vset.pattern.permute.xlu0 0
    %339 = vperm.xlu0 %338, %v293
    %v340 = vpop.permute.xlu0 %339
    %343 = vset.pattern.permute.xlu0 0
    %344 = vperm.xlu0 %343, %v294
    %v345 = vpop.permute.xlu0 %344
    %348 = vset.pattern.permute.xlu0 0
    %349 = vperm.xlu0 %348, %v295
    %v350 = vpop.permute.xlu0 %349
    %353 = vset.pattern.permute.xlu0 0
    %354 = vperm.xlu0 %353, %v296
    %v355 = vpop.permute.xlu0 %354
    %358 = vset.pattern.permute.xlu0 0
    %359 = vperm.xlu0 %358, %v297
    %v360 = vpop.permute.xlu0 %359
    %363 = vset.pattern.permute.xlu0 0
    %364 = vperm.xlu0 %363, %v298
    %v365 = vpop.permute.xlu0 %364
    %368 = vset.pattern.permute.xlu0 0
    %369 = vperm.xlu0 %368, %v299
    %v370 = vpop.permute.xlu0 %369
    %373 = vset.pattern.permute.xlu0 0
    %374 = vperm.xlu0 %373, %v300
    %v375 = vpop.permute.xlu0 %374
    %378 = vset.pattern.permute.xlu0 0
    %379 = vperm.xlu0 %378, %v301
    %v380 = vpop.permute.xlu0 %379
    %v382 = vmul.f32 %v270, %v305
    %v383 = vmul.f32 %v285, %v310
    %v384 = vmul.f32 %v284, %v315
    %v385 = vmul.f32 %v283, %v320
    %v386 = vmul.f32 %v282, %v325
    %v387 = vmul.f32 %v281, %v330
    %v388 = vmul.f32 %v280, %v335
    %v389 = vmul.f32 %v279, %v340
    %v390 = vmul.f32 %v278, %v345
    %v391 = vmul.f32 %v277, %v350
    %v392 = vmul.f32 %v276, %v355
    %v393 = vmul.f32 %v275, %v360
    %v394 = vmul.f32 %v274, %v365
    %v395 = vmul.f32 %v273, %v370
    %v396 = vmul.f32 %v272, %v375
    %v397 = vmul.f32 %v271, %v380
    %v398 = vpack.c.bf16 %v383, %v382
    %v399 = vpack.c.bf16 %v385, %v384
    %v400 = vpack.c.bf16 %v387, %v386
    %v401 = vpack.c.bf16 %v389, %v388
    %v402 = vpack.c.bf16 %v391, %v390
    %v403 = vpack.c.bf16 %v393, %v392
    %v404 = vpack.c.bf16 %v395, %v394
    %v405 = vpack.c.bf16 %v397, %v396
    %s406 = scalar_lea.vmem %s1, 128
    %v407 = vld [vmem:[%s406] sm:$0xff]
    %v408 = vld [vmem:[%s406 + $0x8] sm:$0xff]
    %v409 = vld [vmem:[%s406 + $0x10] sm:$0xff]
    %v410 = vld [vmem:[%s406 + $0x18] sm:$0xff]
    %v411 = vld [vmem:[%s406 + $0x20] sm:$0xff]
    %v412 = vld [vmem:[%s406 + $0x28] sm:$0xff]
    %v413 = vld [vmem:[%s406 + $0x30] sm:$0xff]
    %v414 = vld [vmem:[%s406 + $0x38] sm:$0xff]
    %v415 = vld [vmem:[%s406 + $0x40] sm:$0xff]
    %v416 = vld [vmem:[%s406 + $0x48] sm:$0xff]
    %v417 = vld [vmem:[%s406 + $0x50] sm:$0xff]
    %v418 = vld [vmem:[%s406 + $0x58] sm:$0xff]
    %v419 = vld [vmem:[%s406 + $0x60] sm:$0xff]
    %v420 = vld [vmem:[%s406 + $0x68] sm:$0xff]
    %v421 = vld [vmem:[%s406 + $0x70] sm:$0xff]
    %v422 = vld [vmem:[%s406 + $0x78] sm:$0xff]
    %424 = vset.pattern.permute.xlu0 0
    %425 = vperm.xlu0 %424, %v407
    %v426 = vpop.permute.xlu0 %425
    %429 = vset.pattern.permute.xlu0 0
    %430 = vperm.xlu0 %429, %v408
    %v431 = vpop.permute.xlu0 %430
    %434 = vset.pattern.permute.xlu0 0
    %435 = vperm.xlu0 %434, %v409
    %v436 = vpop.permute.xlu0 %435
    %439 = vset.pattern.permute.xlu0 0
    %440 = vperm.xlu0 %439, %v410
    %v441 = vpop.permute.xlu0 %440
    %444 = vset.pattern.permute.xlu0 0
    %445 = vperm.xlu0 %444, %v411
    %v446 = vpop.permute.xlu0 %445
    %449 = vset.pattern.permute.xlu0 0
    %450 = vperm.xlu0 %449, %v412
    %v451 = vpop.permute.xlu0 %450
    %454 = vset.pattern.permute.xlu0 0
    %455 = vperm.xlu0 %454, %v413
    %v456 = vpop.permute.xlu0 %455
    %459 = vset.pattern.permute.xlu0 0
    %460 = vperm.xlu0 %459, %v414
    %v461 = vpop.permute.xlu0 %460
    %464 = vset.pattern.permute.xlu0 0
    %465 = vperm.xlu0 %464, %v415
    %v466 = vpop.permute.xlu0 %465
    %469 = vset.pattern.permute.xlu0 0
    %470 = vperm.xlu0 %469, %v416
    %v471 = vpop.permute.xlu0 %470
    %474 = vset.pattern.permute.xlu0 0
    %475 = vperm.xlu0 %474, %v417
    %v476 = vpop.permute.xlu0 %475
    %479 = vset.pattern.permute.xlu0 0
    %480 = vperm.xlu0 %479, %v418
    %v481 = vpop.permute.xlu0 %480
    %484 = vset.pattern.permute.xlu0 0
    %485 = vperm.xlu0 %484, %v419
    %v486 = vpop.permute.xlu0 %485
    %489 = vset.pattern.permute.xlu0 0
    %490 = vperm.xlu0 %489, %v420
    %v491 = vpop.permute.xlu0 %490
    %494 = vset.pattern.permute.xlu0 0
    %495 = vperm.xlu0 %494, %v421
    %v496 = vpop.permute.xlu0 %495
    %499 = vset.pattern.permute.xlu0 0
    %500 = vperm.xlu0 %499, %v422
    %v501 = vpop.permute.xlu0 %500
    %v503 = vmul.f32 %v250, %v426
    %v504 = vmul.f32 %v235, %v431
    %v505 = vmul.f32 %v236, %v436
    %v506 = vmul.f32 %v237, %v441
    %v507 = vmul.f32 %v238, %v446
    %v508 = vmul.f32 %v239, %v451
    %v509 = vmul.f32 %v240, %v456
    %v510 = vmul.f32 %v241, %v461
    %v511 = vmul.f32 %v242, %v466
    %v512 = vmul.f32 %v243, %v471
    %v513 = vmul.f32 %v244, %v476
    %v514 = vmul.f32 %v245, %v481
    %v515 = vmul.f32 %v246, %v486
    %v516 = vmul.f32 %v247, %v491
    %v517 = vmul.f32 %v248, %v496
    %v518 = vmul.f32 %v249, %v501
    %v519 = vpack.c.bf16 %v504, %v503
    %v520 = vpack.c.bf16 %v506, %v505
    %v521 = vpack.c.bf16 %v508, %v507
    %v522 = vpack.c.bf16 %v510, %v509
    %v523 = vpack.c.bf16 %v512, %v511
    %v524 = vpack.c.bf16 %v514, %v513
    %v525 = vpack.c.bf16 %v516, %v515
    %v526 = vpack.c.bf16 %v518, %v517
    %v527 = vrot.slane %v235, 1
    %v528 = vrot.slane %v236, 1
    %v529 = vrot.slane %v237, 1
    %v530 = vrot.slane %v238, 1
    %v531 = vrot.slane %v239, 1
    %v532 = vrot.slane %v240, 1
    %v533 = vrot.slane %v241, 1
    %v534 = vrot.slane %v242, 1
    %v535 = vrot.slane %v243, 1
    %v536 = vrot.slane %v244, 1
    %v537 = vrot.slane %v245, 1
    %v538 = vrot.slane %v246, 1
    %v539 = vrot.slane %v247, 1
    %v540 = vrot.slane %v248, 1
    %v541 = vrot.slane %v249, 1
    %v542 = vrot.slane %v250, 1
    %vm543 = vcmp.lt.s32.totalorder %v268, 7
    %v544 = vsel %vm543, %v541, %v542
    %v545 = vsel %vm543, %v540, %v541
    %v546 = vsel %vm543, %v539, %v540
    %v547 = vsel %vm543, %v538, %v539
    %v548 = vsel %vm543, %v537, %v538
    %v549 = vsel %vm543, %v536, %v537
    %v550 = vsel %vm543, %v535, %v536
    %v551 = vsel %vm543, %v534, %v535
    %v552 = vsel %vm543, %v533, %v534
    %v553 = vsel %vm543, %v532, %v533
    %v554 = vsel %vm543, %v531, %v532
    %v555 = vsel %vm543, %v530, %v531
    %v556 = vsel %vm543, %v529, %v530
    %v557 = vsel %vm543, %v528, %v529
    %v558 = vsel %vm543, %v527, %v528
    %v559 = vsel %vm543, %v542, %v527
    %s560 = scalar_lea.vmem %s1, 256
    %v561 = vld [vmem:[%s560] sm:$0xff]
    %v562 = vld [vmem:[%s560 + $0x8] sm:$0xff]
    %v563 = vld [vmem:[%s560 + $0x10] sm:$0xff]
    %v564 = vld [vmem:[%s560 + $0x18] sm:$0xff]
    %v565 = vld [vmem:[%s560 + $0x20] sm:$0xff]
    %v566 = vld [vmem:[%s560 + $0x28] sm:$0xff]
    %v567 = vld [vmem:[%s560 + $0x30] sm:$0xff]
    %v568 = vld [vmem:[%s560 + $0x38] sm:$0xff]
    %v569 = vld [vmem:[%s560 + $0x40] sm:$0xff]
    %v570 = vld [vmem:[%s560 + $0x48] sm:$0xff]
    %v571 = vld [vmem:[%s560 + $0x50] sm:$0xff]
    %v572 = vld [vmem:[%s560 + $0x58] sm:$0xff]
    %v573 = vld [vmem:[%s560 + $0x60] sm:$0xff]
    %v574 = vld [vmem:[%s560 + $0x68] sm:$0xff]
    %v575 = vld [vmem:[%s560 + $0x70] sm:$0xff]
    %v576 = vld [vmem:[%s560 + $0x78] sm:$0xff]
    %578 = vset.pattern.permute.xlu0 0
    %579 = vperm.xlu0 %578, %v561
    %v580 = vpop.permute.xlu0 %579
    %583 = vset.pattern.permute.xlu0 0
    %584 = vperm.xlu0 %583, %v562
    %v585 = vpop.permute.xlu0 %584
    %588 = vset.pattern.permute.xlu0 0
    %589 = vperm.xlu0 %588, %v563
    %v590 = vpop.permute.xlu0 %589
    %593 = vset.pattern.permute.xlu0 0
    %594 = vperm.xlu0 %593, %v564
    %v595 = vpop.permute.xlu0 %594
    %598 = vset.pattern.permute.xlu0 0
    %599 = vperm.xlu0 %598, %v565
    %v600 = vpop.permute.xlu0 %599
    %603 = vset.pattern.permute.xlu0 0
    %604 = vperm.xlu0 %603, %v566
    %v605 = vpop.permute.xlu0 %604
    %608 = vset.pattern.permute.xlu0 0
    %609 = vperm.xlu0 %608, %v567
    %v610 = vpop.permute.xlu0 %609
    %613 = vset.pattern.permute.xlu0 0
    %614 = vperm.xlu0 %613, %v568
    %v615 = vpop.permute.xlu0 %614
    %618 = vset.pattern.permute.xlu0 0
    %619 = vperm.xlu0 %618, %v569
    %v620 = vpop.permute.xlu0 %619
    %623 = vset.pattern.permute.xlu0 0
    %624 = vperm.xlu0 %623, %v570
    %v625 = vpop.permute.xlu0 %624
    %628 = vset.pattern.permute.xlu0 0
    %629 = vperm.xlu0 %628, %v571
    %v630 = vpop.permute.xlu0 %629
    %633 = vset.pattern.permute.xlu0 0
    %634 = vperm.xlu0 %633, %v572
    %v635 = vpop.permute.xlu0 %634
    %638 = vset.pattern.permute.xlu0 0
    %639 = vperm.xlu0 %638, %v573
    %v640 = vpop.permute.xlu0 %639
    %643 = vset.pattern.permute.xlu0 0
    %644 = vperm.xlu0 %643, %v574
    %v645 = vpop.permute.xlu0 %644
    %648 = vset.pattern.permute.xlu0 0
    %649 = vperm.xlu0 %648, %v575
    %v650 = vpop.permute.xlu0 %649
    %653 = vset.pattern.permute.xlu0 0
    %654 = vperm.xlu0 %653, %v576
    %v655 = vpop.permute.xlu0 %654
    %v657 = vmul.f32 %v559, %v580
    %v658 = vmul.f32 %v558, %v585
    %v659 = vmul.f32 %v557, %v590
    %v660 = vmul.f32 %v556, %v595
    %v661 = vmul.f32 %v555, %v600
    %v662 = vmul.f32 %v554, %v605
    %v663 = vmul.f32 %v553, %v610
    %v664 = vmul.f32 %v552, %v615
    %v665 = vmul.f32 %v551, %v620
    %v666 = vmul.f32 %v550, %v625
    %v667 = vmul.f32 %v549, %v630
    %v668 = vmul.f32 %v548, %v635
    %v669 = vmul.f32 %v547, %v640
    %v670 = vmul.f32 %v546, %v645
    %v671 = vmul.f32 %v545, %v650
    %v672 = vmul.f32 %v544, %v655
    %v673 = vpack.c.bf16 %v658, %v657
    %v674 = vpack.c.bf16 %v660, %v659
    %v675 = vpack.c.bf16 %v662, %v661
    %v676 = vpack.c.bf16 %v664, %v663
    %v677 = vpack.c.bf16 %v666, %v665
    %v678 = vpack.c.bf16 %v668, %v667
    %v679 = vpack.c.bf16 %v670, %v669
    %v680 = vpack.c.bf16 %v672, %v671
    %s681 = scalar_lea.vmem %s1, 384
    %v682 = vld [vmem:[%s681] sm:$0xff]
    %v683 = vld [vmem:[%s681 + $0x8] sm:$0xff]
    %v684 = vld [vmem:[%s681 + $0x10] sm:$0xff]
    %v685 = vld [vmem:[%s681 + $0x18] sm:$0xff]
    %v686 = vld [vmem:[%s681 + $0x20] sm:$0xff]
    %v687 = vld [vmem:[%s681 + $0x28] sm:$0xff]
    %v688 = vld [vmem:[%s681 + $0x30] sm:$0xff]
    %v689 = vld [vmem:[%s681 + $0x38] sm:$0xff]
    %v690 = vld [vmem:[%s681 + $0x40] sm:$0xff]
    %v691 = vld [vmem:[%s681 + $0x48] sm:$0xff]
    %v692 = vld [vmem:[%s681 + $0x50] sm:$0xff]
    %v693 = vld [vmem:[%s681 + $0x58] sm:$0xff]
    %v694 = vld [vmem:[%s681 + $0x60] sm:$0xff]
    %v695 = vld [vmem:[%s681 + $0x68] sm:$0xff]
    %v696 = vld [vmem:[%s681 + $0x70] sm:$0xff]
    %v697 = vld [vmem:[%s681 + $0x78] sm:$0xff]
    %699 = vset.pattern.permute.xlu0 0
    %700 = vperm.xlu0 %699, %v682
    %v701 = vpop.permute.xlu0 %700
    %704 = vset.pattern.permute.xlu0 0
    %705 = vperm.xlu0 %704, %v683
    %v706 = vpop.permute.xlu0 %705
    %709 = vset.pattern.permute.xlu0 0
    %710 = vperm.xlu0 %709, %v684
    %v711 = vpop.permute.xlu0 %710
    %714 = vset.pattern.permute.xlu0 0
    %715 = vperm.xlu0 %714, %v685
    %v716 = vpop.permute.xlu0 %715
    %719 = vset.pattern.permute.xlu0 0
    %720 = vperm.xlu0 %719, %v686
    %v721 = vpop.permute.xlu0 %720
    %724 = vset.pattern.permute.xlu0 0
    %725 = vperm.xlu0 %724, %v687
    %v726 = vpop.permute.xlu0 %725
    %729 = vset.pattern.permute.xlu0 0
    %730 = vperm.xlu0 %729, %v688
    %v731 = vpop.permute.xlu0 %730
    %734 = vset.pattern.permute.xlu0 0
    %735 = vperm.xlu0 %734, %v689
    %v736 = vpop.permute.xlu0 %735
    %739 = vset.pattern.permute.xlu0 0
    %740 = vperm.xlu0 %739, %v690
    %v741 = vpop.permute.xlu0 %740
    %744 = vset.pattern.permute.xlu0 0
    %745 = vperm.xlu0 %744, %v691
    %v746 = vpop.permute.xlu0 %745
    %749 = vset.pattern.permute.xlu0 0
    %750 = vperm.xlu0 %749, %v692
    %v751 = vpop.permute.xlu0 %750
    %754 = vset.pattern.permute.xlu0 0
    %755 = vperm.xlu0 %754, %v693
    %v756 = vpop.permute.xlu0 %755
    %759 = vset.pattern.permute.xlu0 0
    %760 = vperm.xlu0 %759, %v694
    %v761 = vpop.permute.xlu0 %760
    %764 = vset.pattern.permute.xlu0 0
    %765 = vperm.xlu0 %764, %v695
    %v766 = vpop.permute.xlu0 %765
    %769 = vset.pattern.permute.xlu0 0
    %770 = vperm.xlu0 %769, %v696
    %v771 = vpop.permute.xlu0 %770
    %774 = vset.pattern.permute.xlu0 0
    %775 = vperm.xlu0 %774, %v697
    %v776 = vpop.permute.xlu0 %775
    %v778 = vmul.f32 %v285, %v701
    %v779 = vmul.f32 %v284, %v706
    %v780 = vmul.f32 %v283, %v711
    %v781 = vmul.f32 %v282, %v716
    %v782 = vmul.f32 %v281, %v721
    %v783 = vmul.f32 %v280, %v726
    %v784 = vmul.f32 %v279, %v731
    %v785 = vmul.f32 %v278, %v736
    %v786 = vmul.f32 %v277, %v741
    %v787 = vmul.f32 %v276, %v746
    %v788 = vmul.f32 %v275, %v751
    %v789 = vmul.f32 %v274, %v756
    %v790 = vmul.f32 %v273, %v761
    %v791 = vmul.f32 %v272, %v766
    %v792 = vmul.f32 %v271, %v771
    %v793 = vmul.f32 %v270, %v776
    %v794 = vpack.c.bf16 %v779, %v778
    %v795 = vpack.c.bf16 %v781, %v780
    %v796 = vpack.c.bf16 %v783, %v782
    %v797 = vpack.c.bf16 %v785, %v784
    %v798 = vpack.c.bf16 %v787, %v786
    %v799 = vpack.c.bf16 %v789, %v788
    %v800 = vpack.c.bf16 %v791, %v790
    %v801 = vpack.c.bf16 %v793, %v792
    %s802 = scalar_lea.vmem %s1, 512
    %v803 = vld [vmem:[%s802] sm:$0xff]
    %v804 = vld [vmem:[%s802 + $0x8] sm:$0xff]
    %v805 = vld [vmem:[%s802 + $0x10] sm:$0xff]
    %v806 = vld [vmem:[%s802 + $0x18] sm:$0xff]
    %v807 = vld [vmem:[%s802 + $0x20] sm:$0xff]
    %v808 = vld [vmem:[%s802 + $0x28] sm:$0xff]
    %v809 = vld [vmem:[%s802 + $0x30] sm:$0xff]
    %v810 = vld [vmem:[%s802 + $0x38] sm:$0xff]
    %v811 = vld [vmem:[%s802 + $0x40] sm:$0xff]
    %v812 = vld [vmem:[%s802 + $0x48] sm:$0xff]
    %v813 = vld [vmem:[%s802 + $0x50] sm:$0xff]
    %v814 = vld [vmem:[%s802 + $0x58] sm:$0xff]
    %v815 = vld [vmem:[%s802 + $0x60] sm:$0xff]
    %v816 = vld [vmem:[%s802 + $0x68] sm:$0xff]
    %v817 = vld [vmem:[%s802 + $0x70] sm:$0xff]
    %v818 = vld [vmem:[%s802 + $0x78] sm:$0xff]
    %820 = vset.pattern.permute.xlu0 0
    %821 = vperm.xlu0 %820, %v803
    %v822 = vpop.permute.xlu0 %821
    %825 = vset.pattern.permute.xlu0 0
    %826 = vperm.xlu0 %825, %v804
    %v827 = vpop.permute.xlu0 %826
    %830 = vset.pattern.permute.xlu0 0
    %831 = vperm.xlu0 %830, %v805
    %v832 = vpop.permute.xlu0 %831
    %835 = vset.pattern.permute.xlu0 0
    %836 = vperm.xlu0 %835, %v806
    %v837 = vpop.permute.xlu0 %836
    %840 = vset.pattern.permute.xlu0 0
    %841 = vperm.xlu0 %840, %v807
    %v842 = vpop.permute.xlu0 %841
    %845 = vset.pattern.permute.xlu0 0
    %846 = vperm.xlu0 %845, %v808
    %v847 = vpop.permute.xlu0 %846
    %850 = vset.pattern.permute.xlu0 0
    %851 = vperm.xlu0 %850, %v809
    %v852 = vpop.permute.xlu0 %851
    %855 = vset.pattern.permute.xlu0 0
    %856 = vperm.xlu0 %855, %v810
    %v857 = vpop.permute.xlu0 %856
    %860 = vset.pattern.permute.xlu0 0
    %861 = vperm.xlu0 %860, %v811
    %v862 = vpop.permute.xlu0 %861
    %865 = vset.pattern.permute.xlu0 0
    %866 = vperm.xlu0 %865, %v812
    %v867 = vpop.permute.xlu0 %866
    %870 = vset.pattern.permute.xlu0 0
    %871 = vperm.xlu0 %870, %v813
    %v872 = vpop.permute.xlu0 %871
    %875 = vset.pattern.permute.xlu0 0
    %876 = vperm.xlu0 %875, %v814
    %v877 = vpop.permute.xlu0 %876
    %880 = vset.pattern.permute.xlu0 0
    %881 = vperm.xlu0 %880, %v815
    %v882 = vpop.permute.xlu0 %881
    %885 = vset.pattern.permute.xlu0 0
    %886 = vperm.xlu0 %885, %v816
    %v887 = vpop.permute.xlu0 %886
    %890 = vset.pattern.permute.xlu0 0
    %891 = vperm.xlu0 %890, %v817
    %v892 = vpop.permute.xlu0 %891
    %895 = vset.pattern.permute.xlu0 0
    %896 = vperm.xlu0 %895, %v818
    %v897 = vpop.permute.xlu0 %896
    %v899 = vmul.f32 %v235, %v822
    %v900 = vmul.f32 %v236, %v827
    %v901 = vmul.f32 %v237, %v832
    %v902 = vmul.f32 %v238, %v837
    %v903 = vmul.f32 %v239, %v842
    %v904 = vmul.f32 %v240, %v847
    %v905 = vmul.f32 %v241, %v852
    %v906 = vmul.f32 %v242, %v857
    %v907 = vmul.f32 %v243, %v862
    %v908 = vmul.f32 %v244, %v867
    %v909 = vmul.f32 %v245, %v872
    %v910 = vmul.f32 %v246, %v877
    %v911 = vmul.f32 %v247, %v882
    %v912 = vmul.f32 %v248, %v887
    %v913 = vmul.f32 %v249, %v892
    %v914 = vmul.f32 %v250, %v897
    %v915 = vpack.c.bf16 %v900, %v899
    %v916 = vpack.c.bf16 %v902, %v901
    %v917 = vpack.c.bf16 %v904, %v903
    %v918 = vpack.c.bf16 %v906, %v905
    %v919 = vpack.c.bf16 %v908, %v907
    %v920 = vpack.c.bf16 %v910, %v909
    %v921 = vpack.c.bf16 %v912, %v911
    %v922 = vpack.c.bf16 %v914, %v913
    %s923 = scalar_lea.vmem %s1, 640
    %v924 = vld [vmem:[%s923] sm:$0xff]
    %v925 = vld [vmem:[%s923 + $0x8] sm:$0xff]
    %v926 = vld [vmem:[%s923 + $0x10] sm:$0xff]
    %v927 = vld [vmem:[%s923 + $0x18] sm:$0xff]
    %v928 = vld [vmem:[%s923 + $0x20] sm:$0xff]
    %v929 = vld [vmem:[%s923 + $0x28] sm:$0xff]
    %v930 = vld [vmem:[%s923 + $0x30] sm:$0xff]
    %v931 = vld [vmem:[%s923 + $0x38] sm:$0xff]
    %v932 = vld [vmem:[%s923 + $0x40] sm:$0xff]
    %v933 = vld [vmem:[%s923 + $0x48] sm:$0xff]
    %v934 = vld [vmem:[%s923 + $0x50] sm:$0xff]
    %v935 = vld [vmem:[%s923 + $0x58] sm:$0xff]
    %v936 = vld [vmem:[%s923 + $0x60] sm:$0xff]
    %v937 = vld [vmem:[%s923 + $0x68] sm:$0xff]
    %v938 = vld [vmem:[%s923 + $0x70] sm:$0xff]
    %v939 = vld [vmem:[%s923 + $0x78] sm:$0xff]
    %941 = vset.pattern.permute.xlu0 0
    %942 = vperm.xlu0 %941, %v924
    %v943 = vpop.permute.xlu0 %942
    %946 = vset.pattern.permute.xlu0 0
    %947 = vperm.xlu0 %946, %v925
    %v948 = vpop.permute.xlu0 %947
    %951 = vset.pattern.permute.xlu0 0
    %952 = vperm.xlu0 %951, %v926
    %v953 = vpop.permute.xlu0 %952
    %956 = vset.pattern.permute.xlu0 0
    %957 = vperm.xlu0 %956, %v927
    %v958 = vpop.permute.xlu0 %957
    %961 = vset.pattern.permute.xlu0 0
    %962 = vperm.xlu0 %961, %v928
    %v963 = vpop.permute.xlu0 %962
    %966 = vset.pattern.permute.xlu0 0
    %967 = vperm.xlu0 %966, %v929
    %v968 = vpop.permute.xlu0 %967
    %971 = vset.pattern.permute.xlu0 0
    %972 = vperm.xlu0 %971, %v930
    %v973 = vpop.permute.xlu0 %972
    %976 = vset.pattern.permute.xlu0 0
    %977 = vperm.xlu0 %976, %v931
    %v978 = vpop.permute.xlu0 %977
    %981 = vset.pattern.permute.xlu0 0
    %982 = vperm.xlu0 %981, %v932
    %v983 = vpop.permute.xlu0 %982
    %986 = vset.pattern.permute.xlu0 0
    %987 = vperm.xlu0 %986, %v933
    %v988 = vpop.permute.xlu0 %987
    %991 = vset.pattern.permute.xlu0 0
    %992 = vperm.xlu0 %991, %v934
    %v993 = vpop.permute.xlu0 %992
    %996 = vset.pattern.permute.xlu0 0
    %997 = vperm.xlu0 %996, %v935
    %v998 = vpop.permute.xlu0 %997
    %1001 = vset.pattern.permute.xlu0 0
    %1002 = vperm.xlu0 %1001, %v936
    %v1003 = vpop.permute.xlu0 %1002
    %1006 = vset.pattern.permute.xlu0 0
    %1007 = vperm.xlu0 %1006, %v937
    %v1008 = vpop.permute.xlu0 %1007
    %1011 = vset.pattern.permute.xlu0 0
    %1012 = vperm.xlu0 %1011, %v938
    %v1013 = vpop.permute.xlu0 %1012
    %1016 = vset.pattern.permute.xlu0 0
    %1017 = vperm.xlu0 %1016, %v939
    %v1018 = vpop.permute.xlu0 %1017
    %v1020 = vmul.f32 %v558, %v943
    %v1021 = vmul.f32 %v557, %v948
    %v1022 = vmul.f32 %v556, %v953
    %v1023 = vmul.f32 %v555, %v958
    %v1024 = vmul.f32 %v554, %v963
    %v1025 = vmul.f32 %v553, %v968
    %v1026 = vmul.f32 %v552, %v973
    %v1027 = vmul.f32 %v551, %v978
    %v1028 = vmul.f32 %v550, %v983
    %v1029 = vmul.f32 %v549, %v988
    %v1030 = vmul.f32 %v548, %v993
    %v1031 = vmul.f32 %v547, %v998
    %v1032 = vmul.f32 %v546, %v1003
    %v1033 = vmul.f32 %v545, %v1008
    %v1034 = vmul.f32 %v544, %v1013
    %v1035 = vmul.f32 %v559, %v1018
    %v1036 = vpack.c.bf16 %v1021, %v1020
    %v1037 = vpack.c.bf16 %v1023, %v1022
    %v1038 = vpack.c.bf16 %v1025, %v1024
    %v1039 = vpack.c.bf16 %v1027, %v1026
    %v1040 = vpack.c.bf16 %v1029, %v1028
    %v1041 = vpack.c.bf16 %v1031, %v1030
    %v1042 = vpack.c.bf16 %v1033, %v1032
    %v1043 = vpack.c.bf16 %v1035, %v1034
    %s1044 = scalar_lea.vmem %s1, 768
    %v1045 = vld [vmem:[%s1044] sm:$0xff]
    %v1046 = vld [vmem:[%s1044 + $0x8] sm:$0xff]
    %v1047 = vld [vmem:[%s1044 + $0x10] sm:$0xff]
    %v1048 = vld [vmem:[%s1044 + $0x18] sm:$0xff]
    %v1049 = vld [vmem:[%s1044 + $0x20] sm:$0xff]
    %v1050 = vld [vmem:[%s1044 + $0x28] sm:$0xff]
    %v1051 = vld [vmem:[%s1044 + $0x30] sm:$0xff]
    %v1052 = vld [vmem:[%s1044 + $0x38] sm:$0xff]
    %v1053 = vld [vmem:[%s1044 + $0x40] sm:$0xff]
    %v1054 = vld [vmem:[%s1044 + $0x48] sm:$0xff]
    %v1055 = vld [vmem:[%s1044 + $0x50] sm:$0xff]
    %v1056 = vld [vmem:[%s1044 + $0x58] sm:$0xff]
    %v1057 = vld [vmem:[%s1044 + $0x60] sm:$0xff]
    %v1058 = vld [vmem:[%s1044 + $0x68] sm:$0xff]
    %v1059 = vld [vmem:[%s1044 + $0x70] sm:$0xff]
    %v1060 = vld [vmem:[%s1044 + $0x78] sm:$0xff]
    %1062 = vset.pattern.permute.xlu0 0
    %1063 = vperm.xlu0 %1062, %v1045
    %v1064 = vpop.permute.xlu0 %1063
    %1067 = vset.pattern.permute.xlu0 0
    %1068 = vperm.xlu0 %1067, %v1046
    %v1069 = vpop.permute.xlu0 %1068
    %1072 = vset.pattern.permute.xlu0 0
    %1073 = vperm.xlu0 %1072, %v1047
    %v1074 = vpop.permute.xlu0 %1073
    %1077 = vset.pattern.permute.xlu0 0
    %1078 = vperm.xlu0 %1077, %v1048
    %v1079 = vpop.permute.xlu0 %1078
    %1082 = vset.pattern.permute.xlu0 0
    %1083 = vperm.xlu0 %1082, %v1049
    %v1084 = vpop.permute.xlu0 %1083
    %1087 = vset.pattern.permute.xlu0 0
    %1088 = vperm.xlu0 %1087, %v1050
    %v1089 = vpop.permute.xlu0 %1088
    %1092 = vset.pattern.permute.xlu0 0
    %1093 = vperm.xlu0 %1092, %v1051
    %v1094 = vpop.permute.xlu0 %1093
    %1097 = vset.pattern.permute.xlu0 0
    %1098 = vperm.xlu0 %1097, %v1052
    %v1099 = vpop.permute.xlu0 %1098
    %1102 = vset.pattern.permute.xlu0 0
    %1103 = vperm.xlu0 %1102, %v1053
    %v1104 = vpop.permute.xlu0 %1103
    %1107 = vset.pattern.permute.xlu0 0
    %1108 = vperm.xlu0 %1107, %v1054
    %v1109 = vpop.permute.xlu0 %1108
    %1112 = vset.pattern.permute.xlu0 0
    %1113 = vperm.xlu0 %1112, %v1055
    %v1114 = vpop.permute.xlu0 %1113
    %1117 = vset.pattern.permute.xlu0 0
    %1118 = vperm.xlu0 %1117, %v1056
    %v1119 = vpop.permute.xlu0 %1118
    %1122 = vset.pattern.permute.xlu0 0
    %1123 = vperm.xlu0 %1122, %v1057
    %v1124 = vpop.permute.xlu0 %1123
    %1127 = vset.pattern.permute.xlu0 0
    %1128 = vperm.xlu0 %1127, %v1058
    %v1129 = vpop.permute.xlu0 %1128
    %1132 = vset.pattern.permute.xlu0 0
    %1133 = vperm.xlu0 %1132, %v1059
    %v1134 = vpop.permute.xlu0 %1133
    %1137 = vset.pattern.permute.xlu0 0
    %1138 = vperm.xlu0 %1137, %v1060
    %v1139 = vpop.permute.xlu0 %1138
    %v1141 = vmul.f32 %v284, %v1064
    %v1142 = vmul.f32 %v283, %v1069
    %v1143 = vmul.f32 %v282, %v1074
    %v1144 = vmul.f32 %v281, %v1079
    %v1145 = vmul.f32 %v280, %v1084
    %v1146 = vmul.f32 %v279, %v1089
    %v1147 = vmul.f32 %v278, %v1094
    %v1148 = vmul.f32 %v277, %v1099
    %v1149 = vmul.f32 %v276, %v1104
    %v1150 = vmul.f32 %v275, %v1109
    %v1151 = vmul.f32 %v274, %v1114
    %v1152 = vmul.f32 %v273, %v1119
    %v1153 = vmul.f32 %v272, %v1124
    %v1154 = vmul.f32 %v271, %v1129
    %v1155 = vmul.f32 %v270, %v1134
    %v1156 = vmul.f32 %v285, %v1139
    %v1157 = vpack.c.bf16 %v1142, %v1141
    %v1158 = vpack.c.bf16 %v1144, %v1143
    %v1159 = vpack.c.bf16 %v1146, %v1145
    %v1160 = vpack.c.bf16 %v1148, %v1147
    %v1161 = vpack.c.bf16 %v1150, %v1149
    %v1162 = vpack.c.bf16 %v1152, %v1151
    %v1163 = vpack.c.bf16 %v1154, %v1153
    %v1164 = vpack.c.bf16 %v1156, %v1155
    %s1165 = scalar_lea.vmem %s1, 896
    %v1166 = vld [vmem:[%s1165] sm:$0xff]
    %v1167 = vld [vmem:[%s1165 + $0x8] sm:$0xff]
    %v1168 = vld [vmem:[%s1165 + $0x10] sm:$0xff]
    %v1169 = vld [vmem:[%s1165 + $0x18] sm:$0xff]
    %v1170 = vld [vmem:[%s1165 + $0x20] sm:$0xff]
    %v1171 = vld [vmem:[%s1165 + $0x28] sm:$0xff]
    %v1172 = vld [vmem:[%s1165 + $0x30] sm:$0xff]
    %v1173 = vld [vmem:[%s1165 + $0x38] sm:$0xff]
    %v1174 = vld [vmem:[%s1165 + $0x40] sm:$0xff]
    %v1175 = vld [vmem:[%s1165 + $0x48] sm:$0xff]
    %v1176 = vld [vmem:[%s1165 + $0x50] sm:$0xff]
    %v1177 = vld [vmem:[%s1165 + $0x58] sm:$0xff]
    %v1178 = vld [vmem:[%s1165 + $0x60] sm:$0xff]
    %v1179 = vld [vmem:[%s1165 + $0x68] sm:$0xff]
    %v1180 = vld [vmem:[%s1165 + $0x70] sm:$0xff]
    %v1181 = vld [vmem:[%s1165 + $0x78] sm:$0xff]
    %1183 = vset.pattern.permute.xlu0 0
    %1184 = vperm.xlu0 %1183, %v1166
    %v1185 = vpop.permute.xlu0 %1184
    %1188 = vset.pattern.permute.xlu0 0
    %1189 = vperm.xlu0 %1188, %v1167
    %v1190 = vpop.permute.xlu0 %1189
    %1193 = vset.pattern.permute.xlu0 0
    %1194 = vperm.xlu0 %1193, %v1168
    %v1195 = vpop.permute.xlu0 %1194
    %1198 = vset.pattern.permute.xlu0 0
    %1199 = vperm.xlu0 %1198, %v1169
    %v1200 = vpop.permute.xlu0 %1199
    %1203 = vset.pattern.permute.xlu0 0
    %1204 = vperm.xlu0 %1203, %v1170
    %v1205 = vpop.permute.xlu0 %1204
    %1208 = vset.pattern.permute.xlu0 0
    %1209 = vperm.xlu0 %1208, %v1171
    %v1210 = vpop.permute.xlu0 %1209
    %1213 = vset.pattern.permute.xlu0 0
    %1214 = vperm.xlu0 %1213, %v1172
    %v1215 = vpop.permute.xlu0 %1214
    %1218 = vset.pattern.permute.xlu0 0
    %1219 = vperm.xlu0 %1218, %v1173
    %v1220 = vpop.permute.xlu0 %1219
    %1223 = vset.pattern.permute.xlu0 0
    %1224 = vperm.xlu0 %1223, %v1174
    %v1225 = vpop.permute.xlu0 %1224
    %1228 = vset.pattern.permute.xlu0 0
    %1229 = vperm.xlu0 %1228, %v1175
    %v1230 = vpop.permute.xlu0 %1229
    %1233 = vset.pattern.permute.xlu0 0
    %1234 = vperm.xlu0 %1233, %v1176
    %v1235 = vpop.permute.xlu0 %1234
    %1238 = vset.pattern.permute.xlu0 0
    %1239 = vperm.xlu0 %1238, %v1177
    %v1240 = vpop.permute.xlu0 %1239
    %1243 = vset.pattern.permute.xlu0 0
    %1244 = vperm.xlu0 %1243, %v1178
    %v1245 = vpop.permute.xlu0 %1244
    %1248 = vset.pattern.permute.xlu0 0
    %1249 = vperm.xlu0 %1248, %v1179
    %v1250 = vpop.permute.xlu0 %1249
    %1253 = vset.pattern.permute.xlu0 0
    %1254 = vperm.xlu0 %1253, %v1180
    %v1255 = vpop.permute.xlu0 %1254
    %1258 = vset.pattern.permute.xlu0 0
    %1259 = vperm.xlu0 %1258, %v1181
    %v1260 = vpop.permute.xlu0 %1259
    %v1262 = vmul.f32 %v236, %v1185
    %v1263 = vmul.f32 %v237, %v1190
    %v1264 = vmul.f32 %v238, %v1195
    %v1265 = vmul.f32 %v239, %v1200
    %v1266 = vmul.f32 %v240, %v1205
    %v1267 = vmul.f32 %v241, %v1210
    %v1268 = vmul.f32 %v242, %v1215
    %v1269 = vmul.f32 %v243, %v1220
    %v1270 = vmul.f32 %v244, %v1225
    %v1271 = vmul.f32 %v245, %v1230
    %v1272 = vmul.f32 %v246, %v1235
    %v1273 = vmul.f32 %v247, %v1240
    %v1274 = vmul.f32 %v248, %v1245
    %v1275 = vmul.f32 %v249, %v1250
    %v1276 = vmul.f32 %v250, %v1255
    %v1277 = vmul.f32 %v235, %v1260
    %v1278 = vpack.c.bf16 %v1263, %v1262
    %v1279 = vpack.c.bf16 %v1265, %v1264
    %v1280 = vpack.c.bf16 %v1267, %v1266
    %v1281 = vpack.c.bf16 %v1269, %v1268
    %v1282 = vpack.c.bf16 %v1271, %v1270
    %v1283 = vpack.c.bf16 %v1273, %v1272
    %v1284 = vpack.c.bf16 %v1275, %v1274
    %v1285 = vpack.c.bf16 %v1277, %v1276
    %s1286 = scalar_lea.vmem %s1, 1024
    %v1287 = vld [vmem:[%s1286] sm:$0xff]
    %v1288 = vld [vmem:[%s1286 + $0x8] sm:$0xff]
    %v1289 = vld [vmem:[%s1286 + $0x10] sm:$0xff]
    %v1290 = vld [vmem:[%s1286 + $0x18] sm:$0xff]
    %v1291 = vld [vmem:[%s1286 + $0x20] sm:$0xff]
    %v1292 = vld [vmem:[%s1286 + $0x28] sm:$0xff]
    %v1293 = vld [vmem:[%s1286 + $0x30] sm:$0xff]
    %v1294 = vld [vmem:[%s1286 + $0x38] sm:$0xff]
    %v1295 = vld [vmem:[%s1286 + $0x40] sm:$0xff]
    %v1296 = vld [vmem:[%s1286 + $0x48] sm:$0xff]
    %v1297 = vld [vmem:[%s1286 + $0x50] sm:$0xff]
    %v1298 = vld [vmem:[%s1286 + $0x58] sm:$0xff]
    %v1299 = vld [vmem:[%s1286 + $0x60] sm:$0xff]
    %v1300 = vld [vmem:[%s1286 + $0x68] sm:$0xff]
    %v1301 = vld [vmem:[%s1286 + $0x70] sm:$0xff]
    %v1302 = vld [vmem:[%s1286 + $0x78] sm:$0xff]
    %1304 = vset.pattern.permute.xlu0 0
    %1305 = vperm.xlu0 %1304, %v1287
    %v1306 = vpop.permute.xlu0 %1305
    %1309 = vset.pattern.permute.xlu0 0
    %1310 = vperm.xlu0 %1309, %v1288
    %v1311 = vpop.permute.xlu0 %1310
    %1314 = vset.pattern.permute.xlu0 0
    %1315 = vperm.xlu0 %1314, %v1289
    %v1316 = vpop.permute.xlu0 %1315
    %1319 = vset.pattern.permute.xlu0 0
    %1320 = vperm.xlu0 %1319, %v1290
    %v1321 = vpop.permute.xlu0 %1320
    %1324 = vset.pattern.permute.xlu0 0
    %1325 = vperm.xlu0 %1324, %v1291
    %v1326 = vpop.permute.xlu0 %1325
    %1329 = vset.pattern.permute.xlu0 0
    %1330 = vperm.xlu0 %1329, %v1292
    %v1331 = vpop.permute.xlu0 %1330
    %1334 = vset.pattern.permute.xlu0 0
    %1335 = vperm.xlu0 %1334, %v1293
    %v1336 = vpop.permute.xlu0 %1335
    %1339 = vset.pattern.permute.xlu0 0
    %1340 = vperm.xlu0 %1339, %v1294
    %v1341 = vpop.permute.xlu0 %1340
    %1344 = vset.pattern.permute.xlu0 0
    %1345 = vperm.xlu0 %1344, %v1295
    %v1346 = vpop.permute.xlu0 %1345
    %1349 = vset.pattern.permute.xlu0 0
    %1350 = vperm.xlu0 %1349, %v1296
    %v1351 = vpop.permute.xlu0 %1350
    %1354 = vset.pattern.permute.xlu0 0
    %1355 = vperm.xlu0 %1354, %v1297
    %v1356 = vpop.permute.xlu0 %1355
    %1359 = vset.pattern.permute.xlu0 0
    %1360 = vperm.xlu0 %1359, %v1298
    %v1361 = vpop.permute.xlu0 %1360
    %1364 = vset.pattern.permute.xlu0 0
    %1365 = vperm.xlu0 %1364, %v1299
    %v1366 = vpop.permute.xlu0 %1365
    %1369 = vset.pattern.permute.xlu0 0
    %1370 = vperm.xlu0 %1369, %v1300
    %v1371 = vpop.permute.xlu0 %1370
    %1374 = vset.pattern.permute.xlu0 0
    %1375 = vperm.xlu0 %1374, %v1301
    %v1376 = vpop.permute.xlu0 %1375
    %1379 = vset.pattern.permute.xlu0 0
    %1380 = vperm.xlu0 %1379, %v1302
    %v1381 = vpop.permute.xlu0 %1380
    %v1383 = vmul.f32 %v557, %v1306
    %v1384 = vmul.f32 %v556, %v1311
    %v1385 = vmul.f32 %v555, %v1316
    %v1386 = vmul.f32 %v554, %v1321
    %v1387 = vmul.f32 %v553, %v1326
    %v1388 = vmul.f32 %v552, %v1331
    %v1389 = vmul.f32 %v551, %v1336
    %v1390 = vmul.f32 %v550, %v1341
    %v1391 = vmul.f32 %v549, %v1346
    %v1392 = vmul.f32 %v548, %v1351
    %v1393 = vmul.f32 %v547, %v1356
    %v1394 = vmul.f32 %v546, %v1361
    %v1395 = vmul.f32 %v545, %v1366
    %v1396 = vmul.f32 %v544, %v1371
    %v1397 = vmul.f32 %v559, %v1376
    %v1398 = vmul.f32 %v558, %v1381
    %v1399 = vpack.c.bf16 %v1384, %v1383
    %v1400 = vpack.c.bf16 %v1386, %v1385
    %v1401 = vpack.c.bf16 %v1388, %v1387
    %v1402 = vpack.c.bf16 %v1390, %v1389
    %v1403 = vpack.c.bf16 %v1392, %v1391
    %v1404 = vpack.c.bf16 %v1394, %v1393
    %v1405 = vpack.c.bf16 %v1396, %v1395
    %v1406 = vpack.c.bf16 %v1398, %v1397
    %v1407 = vld [vmem:[%s6] sm:$0xf]
    %v1408 = vld [vmem:[%s6 + $0x4] sm:$0xf]
    %v1409 = vld [vmem:[%s6 + $0x8] sm:$0xf]
    %v1410 = vld [vmem:[%s6 + $0xc] sm:$0xf]
    %v1411 = vld [vmem:[%s6 + $0x10] sm:$0xf]
    %v1412 = vld [vmem:[%s6 + $0x14] sm:$0xf]
    %v1413 = vld [vmem:[%s6 + $0x18] sm:$0xf]
    %v1414 = vld [vmem:[%s6 + $0x1c] sm:$0xf]
    %v1415 = vld [vmem:[%s6 + $0x20] sm:$0xf]
    %v1416 = vld [vmem:[%s6 + $0x24] sm:$0xf]
    %v1417 = vld [vmem:[%s6 + $0x28] sm:$0xf]
    %v1418 = vld [vmem:[%s6 + $0x2c] sm:$0xf]
    %v1419 = vld [vmem:[%s6 + $0x30] sm:$0xf]
    %v1420 = vld [vmem:[%s6 + $0x34] sm:$0xf]
    %v1421 = vld [vmem:[%s6 + $0x38] sm:$0xf]
    %v1422 = vld [vmem:[%s6 + $0x3c] sm:$0xf]
    %v1423 = vld [vmem:[%s6 + $0x40] sm:$0xf]
    %v1424 = vld [vmem:[%s6 + $0x44] sm:$0xf]
    %v1425 = vld [vmem:[%s6 + $0x48] sm:$0xf]
    %v1426 = vld [vmem:[%s6 + $0x4c] sm:$0xf]
    %v1427 = vld [vmem:[%s6 + $0x50] sm:$0xf]
    %v1428 = vld [vmem:[%s6 + $0x54] sm:$0xf]
    %v1429 = vld [vmem:[%s6 + $0x58] sm:$0xf]
    %v1430 = vld [vmem:[%s6 + $0x5c] sm:$0xf]
    %v1431 = vld [vmem:[%s6 + $0x60] sm:$0xf]
    %v1432 = vld [vmem:[%s6 + $0x64] sm:$0xf]
    %v1433 = vld [vmem:[%s6 + $0x68] sm:$0xf]
    %v1434 = vld [vmem:[%s6 + $0x6c] sm:$0xf]
    %v1435 = vld [vmem:[%s6 + $0x70] sm:$0xf]
    %v1436 = vld [vmem:[%s6 + $0x74] sm:$0xf]
    %v1437 = vld [vmem:[%s6 + $0x78] sm:$0xf]
    %v1438 = vld [vmem:[%s6 + $0x7c] sm:$0xf]
    %v1439 = vld [vmem:[%s6 + $0x80] sm:$0xf]
    %v1440 = vld [vmem:[%s6 + $0x84] sm:$0xf]
    %v1441 = vld [vmem:[%s6 + $0x88] sm:$0xf]
    %v1442 = vld [vmem:[%s6 + $0x8c] sm:$0xf]
    %v1443 = vld [vmem:[%s6 + $0x90] sm:$0xf]
    %v1444 = vld [vmem:[%s6 + $0x94] sm:$0xf]
    %v1445 = vld [vmem:[%s6 + $0x98] sm:$0xf]
    %v1446 = vld [vmem:[%s6 + $0x9c] sm:$0xf]
    %v1447 = vld [vmem:[%s6 + $0xa0] sm:$0xf]
    %v1448 = vld [vmem:[%s6 + $0xa4] sm:$0xf]
    %v1449 = vld [vmem:[%s6 + $0xa8] sm:$0xf]
    %v1450 = vld [vmem:[%s6 + $0xac] sm:$0xf]
    %v1451 = vld [vmem:[%s6 + $0xb0] sm:$0xf]
    %v1452 = vld [vmem:[%s6 + $0xb4] sm:$0xf]
    %v1453 = vld [vmem:[%s6 + $0xb8] sm:$0xf]
    %v1454 = vld [vmem:[%s6 + $0xbc] sm:$0xf]
    %v1455 = vld [vmem:[%s6 + $0xc0] sm:$0xf]
    %v1456 = vld [vmem:[%s6 + $0xc4] sm:$0xf]
    %v1457 = vld [vmem:[%s6 + $0xc8] sm:$0xf]
    %v1458 = vld [vmem:[%s6 + $0xcc] sm:$0xf]
    %v1459 = vld [vmem:[%s6 + $0xd0] sm:$0xf]
    %v1460 = vld [vmem:[%s6 + $0xd4] sm:$0xf]
    %v1461 = vld [vmem:[%s6 + $0xd8] sm:$0xf]
    %v1462 = vld [vmem:[%s6 + $0xdc] sm:$0xf]
    %v1463 = vld [vmem:[%s6 + $0xe0] sm:$0xf]
    %v1464 = vld [vmem:[%s6 + $0xe4] sm:$0xf]
    %v1465 = vld [vmem:[%s6 + $0xe8] sm:$0xf]
    %v1466 = vld [vmem:[%s6 + $0xec] sm:$0xf]
    %v1467 = vld [vmem:[%s6 + $0xf0] sm:$0xf]
    %v1468 = vld [vmem:[%s6 + $0xf4] sm:$0xf]
    %v1469 = vld [vmem:[%s6 + $0xf8] sm:$0xf]
    %v1470 = vld [vmem:[%s6 + $0xfc] sm:$0xf]
    %v1471 = vld [vmem:[%s6 + $0x100] sm:$0xf]
    %v1472 = vld [vmem:[%s6 + $0x104] sm:$0xf]
    %v1473 = vld [vmem:[%s6 + $0x108] sm:$0xf]
    %v1474 = vld [vmem:[%s6 + $0x10c] sm:$0xf]
    %v1475 = vld [vmem:[%s6 + $0x110] sm:$0xf]
    %v1476 = vld [vmem:[%s6 + $0x114] sm:$0xf]
    %v1477 = vld [vmem:[%s6 + $0x118] sm:$0xf]
    %v1478 = vld [vmem:[%s6 + $0x11c] sm:$0xf]
    %v1479 = vld [vmem:[%s6 + $0x120] sm:$0xf]
    %v1480 = vld [vmem:[%s6 + $0x124] sm:$0xf]
    %v1481 = vld [vmem:[%s6 + $0x128] sm:$0xf]
    %v1482 = vld [vmem:[%s6 + $0x12c] sm:$0xf]
    %v1483 = vld [vmem:[%s6 + $0x130] sm:$0xf]
    %v1484 = vld [vmem:[%s6 + $0x134] sm:$0xf]
    %v1485 = vld [vmem:[%s6 + $0x138] sm:$0xf]
    %v1486 = vld [vmem:[%s6 + $0x13c] sm:$0xf]
    %v1487 = vld [vmem:[%s6 + $0x140] sm:$0xf]
    %v1488 = vld [vmem:[%s6 + $0x144] sm:$0xf]
    %v1489 = vld [vmem:[%s6 + $0x148] sm:$0xf]
    %v1490 = vld [vmem:[%s6 + $0x14c] sm:$0xf]
    %v1491 = vld [vmem:[%s6 + $0x150] sm:$0xf]
    %v1492 = vld [vmem:[%s6 + $0x154] sm:$0xf]
    %v1493 = vld [vmem:[%s6 + $0x158] sm:$0xf]
    %v1494 = vld [vmem:[%s6 + $0x15c] sm:$0xf]
    %v1495 = vld [vmem:[%s6 + $0x160] sm:$0xf]
    %v1496 = vld [vmem:[%s6 + $0x164] sm:$0xf]
    %v1497 = vld [vmem:[%s6 + $0x168] sm:$0xf]
    %v1498 = vld [vmem:[%s6 + $0x16c] sm:$0xf]
    %v1499 = vld [vmem:[%s6 + $0x170] sm:$0xf]
    %v1500 = vld [vmem:[%s6 + $0x174] sm:$0xf]
    %v1501 = vld [vmem:[%s6 + $0x178] sm:$0xf]
    %v1502 = vld [vmem:[%s6 + $0x17c] sm:$0xf]
    %v1503 = vld [vmem:[%s6 + $0x180] sm:$0xf]
    %v1504 = vld [vmem:[%s6 + $0x184] sm:$0xf]
    %v1505 = vld [vmem:[%s6 + $0x188] sm:$0xf]
    %v1506 = vld [vmem:[%s6 + $0x18c] sm:$0xf]
    %v1507 = vld [vmem:[%s6 + $0x190] sm:$0xf]
    %v1508 = vld [vmem:[%s6 + $0x194] sm:$0xf]
    %v1509 = vld [vmem:[%s6 + $0x198] sm:$0xf]
    %v1510 = vld [vmem:[%s6 + $0x19c] sm:$0xf]
    %v1511 = vld [vmem:[%s6 + $0x1a0] sm:$0xf]
    %v1512 = vld [vmem:[%s6 + $0x1a4] sm:$0xf]
    %v1513 = vld [vmem:[%s6 + $0x1a8] sm:$0xf]
    %v1514 = vld [vmem:[%s6 + $0x1ac] sm:$0xf]
    %v1515 = vld [vmem:[%s6 + $0x1b0] sm:$0xf]
    %v1516 = vld [vmem:[%s6 + $0x1b4] sm:$0xf]
    %v1517 = vld [vmem:[%s6 + $0x1b8] sm:$0xf]
    %v1518 = vld [vmem:[%s6 + $0x1bc] sm:$0xf]
    %v1519 = vld [vmem:[%s6 + $0x1c0] sm:$0xf]
    %v1520 = vld [vmem:[%s6 + $0x1c4] sm:$0xf]
    %v1521 = vld [vmem:[%s6 + $0x1c8] sm:$0xf]
    %v1522 = vld [vmem:[%s6 + $0x1cc] sm:$0xf]
    %v1523 = vld [vmem:[%s6 + $0x1d0] sm:$0xf]
    %v1524 = vld [vmem:[%s6 + $0x1d4] sm:$0xf]
    %v1525 = vld [vmem:[%s6 + $0x1d8] sm:$0xf]
    %v1526 = vld [vmem:[%s6 + $0x1dc] sm:$0xf]
    %v1527 = vld [vmem:[%s6 + $0x1e0] sm:$0xf]
    %v1528 = vld [vmem:[%s6 + $0x1e4] sm:$0xf]
    %v1529 = vld [vmem:[%s6 + $0x1e8] sm:$0xf]
    %v1530 = vld [vmem:[%s6 + $0x1ec] sm:$0xf]
    %v1531 = vld [vmem:[%s6 + $0x1f0] sm:$0xf]
    %v1532 = vld [vmem:[%s6 + $0x1f4] sm:$0xf]
    %v1533 = vld [vmem:[%s6 + $0x1f8] sm:$0xf]
    %v1534 = vld [vmem:[%s6 + $0x1fc] sm:$0xf]
    %v1535 = vld [vmem:[%s6 + $0x200] sm:$0xf]
    %v1536 = vld [vmem:[%s6 + $0x204] sm:$0xf]
    %v1537 = vld [vmem:[%s6 + $0x208] sm:$0xf]
    %v1538 = vld [vmem:[%s6 + $0x20c] sm:$0xf]
    %v1539 = vld [vmem:[%s6 + $0x210] sm:$0xf]
    %v1540 = vld [vmem:[%s6 + $0x214] sm:$0xf]
    %v1541 = vld [vmem:[%s6 + $0x218] sm:$0xf]
    %v1542 = vld [vmem:[%s6 + $0x21c] sm:$0xf]
    %v1543 = vld [vmem:[%s6 + $0x220] sm:$0xf]
    %v1544 = vld [vmem:[%s6 + $0x224] sm:$0xf]
    %v1545 = vld [vmem:[%s6 + $0x228] sm:$0xf]
    %v1546 = vld [vmem:[%s6 + $0x22c] sm:$0xf]
    %v1547 = vld [vmem:[%s6 + $0x230] sm:$0xf]
    %v1548 = vld [vmem:[%s6 + $0x234] sm:$0xf]
    %v1549 = vld [vmem:[%s6 + $0x238] sm:$0xf]
    %v1550 = vld [vmem:[%s6 + $0x23c] sm:$0xf]
    %v1551 = vld [vmem:[%s7] sm:$0x1]
    %v1553 = vlaneseq
    %v1554 = vshrl.u32 %v1553, 7
    %v1555 = vsub.s32 0, %v1554
    %v1556 = vrot.slane %v1551, %v1555
    %v1702 = vunpack.c.l.b16 %v1407
    %v1703 = vunpack.c.l.b16 %v1408
    %v1704 = vunpack.c.l.b16 %v1409
    %v1705 = vunpack.c.l.b16 %v1410
    %v1706 = vunpack.c.l.b16 %v1411
    %v1707 = vunpack.c.l.b16 %v1412
    %v1708 = vunpack.c.l.b16 %v1413
    %v1709 = vunpack.c.l.b16 %v1414
    %v1710 = vunpack.c.l.b16 %v1415
    %v1711 = vunpack.c.l.b16 %v1416
    %v1712 = vunpack.c.l.b16 %v1417
    %v1713 = vunpack.c.l.b16 %v1418
    %v1714 = vunpack.c.l.b16 %v1419
    %v1715 = vunpack.c.l.b16 %v1420
    %v1716 = vunpack.c.l.b16 %v1421
    %v1717 = vunpack.c.l.b16 %v1422
    %v1718 = vunpack.c.l.b16 %v1423
    %v1719 = vunpack.c.l.b16 %v1424
    %v1720 = vunpack.c.l.b16 %v1425
    %v1721 = vunpack.c.l.b16 %v1426
    %v1722 = vunpack.c.l.b16 %v1427
    %v1723 = vunpack.c.l.b16 %v1428
    %v1724 = vunpack.c.l.b16 %v1429
    %v1725 = vunpack.c.l.b16 %v1430
    %v1726 = vunpack.c.l.b16 %v1431
    %v1727 = vunpack.c.l.b16 %v1432
    %v1728 = vunpack.c.l.b16 %v1433
    %v1729 = vunpack.c.l.b16 %v1434
    %v1730 = vunpack.c.l.b16 %v1435
    %v1731 = vunpack.c.l.b16 %v1436
    %v1732 = vunpack.c.l.b16 %v1437
    %v1733 = vunpack.c.l.b16 %v1438
    %v1734 = vunpack.c.l.b16 %v1439
    %v1735 = vunpack.c.l.b16 %v1440
    %v1736 = vunpack.c.l.b16 %v1441
    %v1737 = vunpack.c.l.b16 %v1442
    %v1738 = vunpack.c.l.b16 %v1443
    %v1739 = vunpack.c.l.b16 %v1444
    %v1740 = vunpack.c.l.b16 %v1445
    %v1741 = vunpack.c.l.b16 %v1446
    %v1742 = vunpack.c.l.b16 %v1447
    %v1743 = vunpack.c.l.b16 %v1448
    %v1744 = vunpack.c.l.b16 %v1449
    %v1745 = vunpack.c.l.b16 %v1450
    %v1746 = vunpack.c.l.b16 %v1451
    %v1747 = vunpack.c.l.b16 %v1452
    %v1748 = vunpack.c.l.b16 %v1453
    %v1749 = vunpack.c.l.b16 %v1454
    %v1750 = vunpack.c.l.b16 %v1455
    %v1751 = vunpack.c.l.b16 %v1456
    %v1752 = vunpack.c.l.b16 %v1457
    %v1753 = vunpack.c.l.b16 %v1458
    %v1754 = vunpack.c.l.b16 %v1459
    %v1755 = vunpack.c.l.b16 %v1460
    %v1756 = vunpack.c.l.b16 %v1461
    %v1757 = vunpack.c.l.b16 %v1462
    %v1758 = vunpack.c.l.b16 %v1463
    %v1759 = vunpack.c.l.b16 %v1464
    %v1760 = vunpack.c.l.b16 %v1465
    %v1761 = vunpack.c.l.b16 %v1466
    %v1762 = vunpack.c.l.b16 %v1467
    %v1763 = vunpack.c.l.b16 %v1468
    %v1764 = vunpack.c.l.b16 %v1469
    %v1765 = vunpack.c.l.b16 %v1470
    %v1766 = vunpack.c.l.b16 %v1471
    %v1767 = vunpack.c.l.b16 %v1472
    %v1768 = vunpack.c.l.b16 %v1473
    %v1769 = vunpack.c.l.b16 %v1474
    %v1770 = vunpack.c.l.b16 %v1475
    %v1771 = vunpack.c.l.b16 %v1476
    %v1772 = vunpack.c.l.b16 %v1477
    %v1773 = vunpack.c.l.b16 %v1478
    %v1774 = vunpack.c.l.b16 %v1479
    %v1775 = vunpack.c.l.b16 %v1480
    %v1776 = vunpack.c.l.b16 %v1481
    %v1777 = vunpack.c.l.b16 %v1482
    %v1778 = vunpack.c.l.b16 %v1483
    %v1779 = vunpack.c.l.b16 %v1484
    %v1780 = vunpack.c.l.b16 %v1485
    %v1781 = vunpack.c.l.b16 %v1486
    %v1782 = vunpack.c.l.b16 %v1487
    %v1783 = vunpack.c.l.b16 %v1488
    %v1784 = vunpack.c.l.b16 %v1489
    %v1785 = vunpack.c.l.b16 %v1490
    %v1786 = vunpack.c.l.b16 %v1491
    %v1787 = vunpack.c.l.b16 %v1492
    %v1788 = vunpack.c.l.b16 %v1493
    %v1789 = vunpack.c.l.b16 %v1494
    %v1790 = vunpack.c.l.b16 %v1495
    %v1791 = vunpack.c.l.b16 %v1496
    %v1792 = vunpack.c.l.b16 %v1497
    %v1793 = vunpack.c.l.b16 %v1498
    %v1794 = vunpack.c.l.b16 %v1499
    %v1795 = vunpack.c.l.b16 %v1500
    %v1796 = vunpack.c.l.b16 %v1501
    %v1797 = vunpack.c.l.b16 %v1502
    %v1798 = vunpack.c.l.b16 %v1503
    %v1799 = vunpack.c.l.b16 %v1504
    %v1800 = vunpack.c.l.b16 %v1505
    %v1801 = vunpack.c.l.b16 %v1506
    %v1802 = vunpack.c.l.b16 %v1507
    %v1803 = vunpack.c.l.b16 %v1508
    %v1804 = vunpack.c.l.b16 %v1509
    %v1805 = vunpack.c.l.b16 %v1510
    %v1806 = vunpack.c.l.b16 %v1511
    %v1807 = vunpack.c.l.b16 %v1512
    %v1808 = vunpack.c.l.b16 %v1513
    %v1809 = vunpack.c.l.b16 %v1514
    %v1810 = vunpack.c.l.b16 %v1515
    %v1811 = vunpack.c.l.b16 %v1516
    %v1812 = vunpack.c.l.b16 %v1517
    %v1813 = vunpack.c.l.b16 %v1518
    %v1814 = vunpack.c.l.b16 %v1519
    %v1815 = vunpack.c.l.b16 %v1520
    %v1816 = vunpack.c.l.b16 %v1521
    %v1817 = vunpack.c.l.b16 %v1522
    %v1818 = vunpack.c.l.b16 %v1523
    %v1819 = vunpack.c.l.b16 %v1524
    %v1820 = vunpack.c.l.b16 %v1525
    %v1821 = vunpack.c.l.b16 %v1526
    %v1822 = vunpack.c.l.b16 %v1527
    %v1823 = vunpack.c.l.b16 %v1528
    %v1824 = vunpack.c.l.b16 %v1529
    %v1825 = vunpack.c.l.b16 %v1530
    %v1826 = vunpack.c.l.b16 %v1531
    %v1827 = vunpack.c.l.b16 %v1532
    %v1828 = vunpack.c.l.b16 %v1533
    %v1829 = vunpack.c.l.b16 %v1534
    %v1830 = vunpack.c.l.b16 %v1535
    %v1831 = vunpack.c.l.b16 %v1536
    %v1832 = vunpack.c.l.b16 %v1537
    %v1833 = vunpack.c.l.b16 %v1538
    %v1834 = vunpack.c.l.b16 %v1539
    %v1835 = vunpack.c.l.b16 %v1540
    %v1836 = vunpack.c.l.b16 %v1541
    %v1837 = vunpack.c.l.b16 %v1542
    %v1838 = vunpack.c.l.b16 %v1543
    %v1839 = vunpack.c.l.b16 %v1544
    %v1840 = vunpack.c.l.b16 %v1545
    %v1841 = vunpack.c.l.b16 %v1546
    %v1842 = vunpack.c.l.b16 %v1547
    %v1843 = vunpack.c.l.b16 %v1548
    %v1844 = vunpack.c.l.b16 %v1549
    %v1845 = vunpack.c.l.b16 %v1550
    %v1846 = vpack.c.b16 %v1703, %v1702
    %v1847 = vpack.c.b16 %v1705, %v1704
    %v1848 = vpack.c.b16 %v1707, %v1706
    %v1849 = vpack.c.b16 %v1709, %v1708
    %v1850 = vpack.c.b16 %v1711, %v1710
    %v1851 = vpack.c.b16 %v1713, %v1712
    %v1852 = vpack.c.b16 %v1715, %v1714
    %v1853 = vpack.c.b16 %v1717, %v1716
    %v1854 = vpack.c.b16 %v1719, %v1718
    %v1855 = vpack.c.b16 %v1721, %v1720
    %v1856 = vpack.c.b16 %v1723, %v1722
    %v1857 = vpack.c.b16 %v1725, %v1724
    %v1858 = vpack.c.b16 %v1727, %v1726
    %v1859 = vpack.c.b16 %v1729, %v1728
    %v1860 = vpack.c.b16 %v1731, %v1730
    %v1861 = vpack.c.b16 %v1733, %v1732
    %v1862 = vpack.c.b16 %v1735, %v1734
    %v1863 = vpack.c.b16 %v1737, %v1736
    %v1864 = vpack.c.b16 %v1739, %v1738
    %v1865 = vpack.c.b16 %v1741, %v1740
    %v1866 = vpack.c.b16 %v1743, %v1742
    %v1867 = vpack.c.b16 %v1745, %v1744
    %v1868 = vpack.c.b16 %v1747, %v1746
    %v1869 = vpack.c.b16 %v1749, %v1748
    %v1870 = vpack.c.b16 %v1751, %v1750
    %v1871 = vpack.c.b16 %v1753, %v1752
    %v1872 = vpack.c.b16 %v1755, %v1754
    %v1873 = vpack.c.b16 %v1757, %v1756
    %v1874 = vpack.c.b16 %v1759, %v1758
    %v1875 = vpack.c.b16 %v1761, %v1760
    %v1876 = vpack.c.b16 %v1763, %v1762
    %v1877 = vpack.c.b16 %v1765, %v1764
    %v1878 = vpack.c.b16 %v1767, %v1766
    %v1879 = vpack.c.b16 %v1769, %v1768
    %v1880 = vpack.c.b16 %v1771, %v1770
    %v1881 = vpack.c.b16 %v1773, %v1772
    %v1882 = vpack.c.b16 %v1775, %v1774
    %v1883 = vpack.c.b16 %v1777, %v1776
    %v1884 = vpack.c.b16 %v1779, %v1778
    %v1885 = vpack.c.b16 %v1781, %v1780
    %v1886 = vpack.c.b16 %v1783, %v1782
    %v1887 = vpack.c.b16 %v1785, %v1784
    %v1888 = vpack.c.b16 %v1787, %v1786
    %v1889 = vpack.c.b16 %v1789, %v1788
    %v1890 = vpack.c.b16 %v1791, %v1790
    %v1891 = vpack.c.b16 %v1793, %v1792
    %v1892 = vpack.c.b16 %v1795, %v1794
    %v1893 = vpack.c.b16 %v1797, %v1796
    %v1894 = vpack.c.b16 %v1799, %v1798
    %v1895 = vpack.c.b16 %v1801, %v1800
    %v1896 = vpack.c.b16 %v1803, %v1802
    %v1897 = vpack.c.b16 %v1805, %v1804
    %v1898 = vpack.c.b16 %v1807, %v1806
    %v1899 = vpack.c.b16 %v1809, %v1808
    %v1900 = vpack.c.b16 %v1811, %v1810
    %v1901 = vpack.c.b16 %v1813, %v1812
    %v1902 = vpack.c.b16 %v1815, %v1814
    %v1903 = vpack.c.b16 %v1817, %v1816
    %v1904 = vpack.c.b16 %v1819, %v1818
    %v1905 = vpack.c.b16 %v1821, %v1820
    %v1906 = vpack.c.b16 %v1823, %v1822
    %v1907 = vpack.c.b16 %v1825, %v1824
    %v1908 = vpack.c.b16 %v1827, %v1826
    %v1909 = vpack.c.b16 %v1829, %v1828
    %v1910 = vpack.c.b16 %v1831, %v1830
    %v1911 = vpack.c.b16 %v1833, %v1832
    %v1912 = vpack.c.b16 %v1835, %v1834
    %v1913 = vpack.c.b16 %v1837, %v1836
    %v1914 = vpack.c.b16 %v1839, %v1838
    %v1915 = vpack.c.b16 %v1841, %v1840
    %v1916 = vpack.c.b16 %v1843, %v1842
    %v1917 = vpack.c.b16 %v1845, %v1844
    %1990 = vmatprep.subr.bf16.mxu0 0
    %1991 = vmatpush1.bf16.msra.mxu0 %v1853
    %1992 = vmatprep.subr.bf16.mxu0 0
    %1993 = vmatpush1.bf16.msra.mxu0 %v1852
    %1994 = vmatprep.subr.bf16.mxu0 0
    %1995 = vmatpush1.bf16.msra.mxu0 %v1851
    %1996 = vmatprep.subr.bf16.mxu0 0
    %1997 = vmatpush1.bf16.msra.mxu0 %v1850
    %1998 = vmatprep.subr.bf16.mxu0 0
    %1999 = vmatpush1.bf16.msra.mxu0 %v1849
    %2000 = vmatprep.subr.bf16.mxu0 0
    %2001 = vmatpush1.bf16.msra.mxu0 %v1848
    %2002 = vmatprep.subr.bf16.mxu0 0
    %2003 = vmatpush1.bf16.msra.mxu0 %v1847
    %2004 = vmatprep.subr.bf16.mxu0 0
    %2005 = vmatpush1.bf16.msra.mxu0 %v1846
    %2006 = vmatprep.subr.bf16.mxu0 0
    %2007 = vmatpush2.bf16.msra.mxu0 %v1861
    %2008 = vmatprep.subr.bf16.mxu0 0
    %2009 = vmatpush2.bf16.msra.mxu0 %v1860
    %2010 = vmatprep.subr.bf16.mxu0 0
    %2011 = vmatpush2.bf16.msra.mxu0 %v1859
    %2012 = vmatprep.subr.bf16.mxu0 0
    %2013 = vmatpush2.bf16.msra.mxu0 %v1858
    %2014 = vmatprep.subr.bf16.mxu0 0
    %2015 = vmatpush2.bf16.msra.mxu0 %v1857
    %2016 = vmatprep.subr.bf16.mxu0 0
    %2017 = vmatpush2.bf16.msra.mxu0 %v1856
    %2018 = vmatprep.subr.bf16.mxu0 0
    %2019 = vmatpush2.bf16.msra.mxu0 %v1855
    %2020 = vmatprep.subr.bf16.mxu0 0
    %2021 = vmatpush2.bf16.msra.mxu0 %v1854
    %2022 = vmatprep.mubr.bf16.mxu0 %v519
    %2023 = vmatmul.mubr.bf16.gmra.mxu0 %v398
    %v2024 = vpop.f32.mrf.mxu0
    %v2025 = vadd.f32 %v1556, %v2024
    %v2026 = vpop.f32.mrf.mxu0
    %v2027 = vpop.f32.mrf.mxu0
    %v2028 = vadd.f32 %v1556, %v2027
    %v2029 = vpop.f32.mrf.mxu0
    %2030 = vmatprep.mubr.bf16.mxu0 %v520
    %2031 = vmatmul.mubr.bf16.gmra.mxu0 %v399
    %v2032 = vpop.f32.mrf.mxu0
    %v2033 = vadd.f32 %v1556, %v2032
    %v2034 = vpop.f32.mrf.mxu0
    %v2035 = vpop.f32.mrf.mxu0
    %v2036 = vadd.f32 %v1556, %v2035
    %v2037 = vpop.f32.mrf.mxu0
    %2038 = vmatprep.mubr.bf16.mxu0 %v521
    %2039 = vmatmul.mubr.bf16.gmra.mxu0 %v400
    %v2040 = vpop.f32.mrf.mxu0
    %v2041 = vadd.f32 %v1556, %v2040
    %v2042 = vpop.f32.mrf.mxu0
    %v2043 = vpop.f32.mrf.mxu0
    %v2044 = vadd.f32 %v1556, %v2043
    %v2045 = vpop.f32.mrf.mxu0
    %2046 = vmatprep.mubr.bf16.mxu0 %v522
    %2047 = vmatmul.mubr.bf16.gmra.mxu0 %v401
    %v2048 = vpop.f32.mrf.mxu0
    %v2049 = vadd.f32 %v1556, %v2048
    %v2050 = vpop.f32.mrf.mxu0
    %v2051 = vpop.f32.mrf.mxu0
    %v2052 = vadd.f32 %v1556, %v2051
    %v2053 = vpop.f32.mrf.mxu0
    %2054 = vmatprep.mubr.bf16.mxu0 %v523
    %2055 = vmatmul.mubr.bf16.gmra.mxu0 %v402
    %v2056 = vpop.f32.mrf.mxu0
    %v2057 = vadd.f32 %v1556, %v2056
    %v2058 = vpop.f32.mrf.mxu0
    %v2059 = vpop.f32.mrf.mxu0
    %v2060 = vadd.f32 %v1556, %v2059
    %v2061 = vpop.f32.mrf.mxu0
    %2062 = vmatprep.mubr.bf16.mxu0 %v524
    %2063 = vmatmul.mubr.bf16.gmra.mxu0 %v403
    %v2064 = vpop.f32.mrf.mxu0
    %v2065 = vadd.f32 %v1556, %v2064
    %v2066 = vpop.f32.mrf.mxu0
    %v2067 = vpop.f32.mrf.mxu0
    %v2068 = vadd.f32 %v1556, %v2067
    %v2069 = vpop.f32.mrf.mxu0
    %2070 = vmatprep.mubr.bf16.mxu0 %v525
    %2071 = vmatmul.mubr.bf16.gmra.mxu0 %v404
    %v2072 = vpop.f32.mrf.mxu0
    %v2073 = vadd.f32 %v1556, %v2072
    %v2074 = vpop.f32.mrf.mxu0
    %v2075 = vpop.f32.mrf.mxu0
    %v2076 = vadd.f32 %v1556, %v2075
    %v2077 = vpop.f32.mrf.mxu0
    %2078 = vmatprep.mubr.bf16.mxu0 %v526
    %2079 = vmatmul.mubr.bf16.gmra.mxu0 %v405
    %v2080 = vpop.f32.mrf.mxu0
    %v2081 = vadd.f32 %v1556, %v2080
    %v2082 = vpop.f32.mrf.mxu0
    %v2083 = vpop.f32.mrf.mxu0
    %v2084 = vadd.f32 %v1556, %v2083
    %v2085 = vpop.f32.mrf.mxu0
    %2086 = vdwg.mxu0
    %2087 = vmatprep.subr.bf16.mxu0 0
    %2088 = vmatpush1.bf16.msra.mxu0 %v1869
    %2089 = vmatprep.subr.bf16.mxu0 0
    %2090 = vmatpush1.bf16.msra.mxu0 %v1868
    %2091 = vmatprep.subr.bf16.mxu0 0
    %2092 = vmatpush1.bf16.msra.mxu0 %v1867
    %2093 = vmatprep.subr.bf16.mxu0 0
    %2094 = vmatpush1.bf16.msra.mxu0 %v1866
    %2095 = vmatprep.subr.bf16.mxu0 0
    %2096 = vmatpush1.bf16.msra.mxu0 %v1865
    %2097 = vmatprep.subr.bf16.mxu0 0
    %2098 = vmatpush1.bf16.msra.mxu0 %v1864
    %2099 = vmatprep.subr.bf16.mxu0 0
    %2100 = vmatpush1.bf16.msra.mxu0 %v1863
    %2101 = vmatprep.subr.bf16.mxu0 0
    %2102 = vmatpush1.bf16.msra.mxu0 %v1862
    %2103 = vmatprep.subr.bf16.mxu0 0
    %2104 = vmatpush2.bf16.msra.mxu0 %v1877
    %2105 = vmatprep.subr.bf16.mxu0 0
    %2106 = vmatpush2.bf16.msra.mxu0 %v1876
    %2107 = vmatprep.subr.bf16.mxu0 0
    %2108 = vmatpush2.bf16.msra.mxu0 %v1875
    %2109 = vmatprep.subr.bf16.mxu0 0
    %2110 = vmatpush2.bf16.msra.mxu0 %v1874
    %2111 = vmatprep.subr.bf16.mxu0 0
    %2112 = vmatpush2.bf16.msra.mxu0 %v1873
    %2113 = vmatprep.subr.bf16.mxu0 0
    %2114 = vmatpush2.bf16.msra.mxu0 %v1872
    %2115 = vmatprep.subr.bf16.mxu0 0
    %2116 = vmatpush2.bf16.msra.mxu0 %v1871
    %2117 = vmatprep.subr.bf16.mxu0 0
    %2118 = vmatpush2.bf16.msra.mxu0 %v1870
    %2119 = vmatprep.mubr.bf16.mxu0 %v794
    %2120 = vmatmul.mubr.bf16.gmra.mxu0 %v673
    %v2121 = vpop.f32.mrf.mxu0
    %v2122 = vadd.f32 %v2025, %v2121
    %v2123 = vpop.f32.mrf.mxu0
    %v2124 = vpop.f32.mrf.mxu0
    %v2125 = vadd.f32 %v2028, %v2124
    %v2126 = vpop.f32.mrf.mxu0
    %2127 = vmatprep.mubr.bf16.mxu0 %v795
    %2128 = vmatmul.mubr.bf16.gmra.mxu0 %v674
    %v2129 = vpop.f32.mrf.mxu0
    %v2130 = vadd.f32 %v2033, %v2129
    %v2131 = vpop.f32.mrf.mxu0
    %v2132 = vpop.f32.mrf.mxu0
    %v2133 = vadd.f32 %v2036, %v2132
    %v2134 = vpop.f32.mrf.mxu0
    %2135 = vmatprep.mubr.bf16.mxu0 %v796
    %2136 = vmatmul.mubr.bf16.gmra.mxu0 %v675
    %v2137 = vpop.f32.mrf.mxu0
    %v2138 = vadd.f32 %v2041, %v2137
    %v2139 = vpop.f32.mrf.mxu0
    %v2140 = vpop.f32.mrf.mxu0
    %v2141 = vadd.f32 %v2044, %v2140
    %v2142 = vpop.f32.mrf.mxu0
    %2143 = vmatprep.mubr.bf16.mxu0 %v797
    %2144 = vmatmul.mubr.bf16.gmra.mxu0 %v676
    %v2145 = vpop.f32.mrf.mxu0
    %v2146 = vadd.f32 %v2049, %v2145
    %v2147 = vpop.f32.mrf.mxu0
    %v2148 = vpop.f32.mrf.mxu0
    %v2149 = vadd.f32 %v2052, %v2148
    %v2150 = vpop.f32.mrf.mxu0
    %2151 = vmatprep.mubr.bf16.mxu0 %v798
    %2152 = vmatmul.mubr.bf16.gmra.mxu0 %v677
    %v2153 = vpop.f32.mrf.mxu0
    %v2154 = vadd.f32 %v2057, %v2153
    %v2155 = vpop.f32.mrf.mxu0
    %v2156 = vpop.f32.mrf.mxu0
    %v2157 = vadd.f32 %v2060, %v2156
    %v2158 = vpop.f32.mrf.mxu0
    %2159 = vmatprep.mubr.bf16.mxu0 %v799
    %2160 = vmatmul.mubr.bf16.gmra.mxu0 %v678
    %v2161 = vpop.f32.mrf.mxu0
    %v2162 = vadd.f32 %v2065, %v2161
    %v2163 = vpop.f32.mrf.mxu0
    %v2164 = vpop.f32.mrf.mxu0
    %v2165 = vadd.f32 %v2068, %v2164
    %v2166 = vpop.f32.mrf.mxu0
    %2167 = vmatprep.mubr.bf16.mxu0 %v800
    %2168 = vmatmul.mubr.bf16.gmra.mxu0 %v679
    %v2169 = vpop.f32.mrf.mxu0
    %v2170 = vadd.f32 %v2073, %v2169
    %v2171 = vpop.f32.mrf.mxu0
    %v2172 = vpop.f32.mrf.mxu0
    %v2173 = vadd.f32 %v2076, %v2172
    %v2174 = vpop.f32.mrf.mxu0
    %2175 = vmatprep.mubr.bf16.mxu0 %v801
    %2176 = vmatmul.mubr.bf16.gmra.mxu0 %v680
    %v2177 = vpop.f32.mrf.mxu0
    %v2178 = vadd.f32 %v2081, %v2177
    %v2179 = vpop.f32.mrf.mxu0
    %v2180 = vpop.f32.mrf.mxu0
    %v2181 = vadd.f32 %v2084, %v2180
    %v2182 = vpop.f32.mrf.mxu0
    %2183 = vdwg.mxu0
    %2184 = vmatprep.subr.bf16.mxu0 0
    %2185 = vmatpush1.bf16.msra.mxu0 %v1885
    %2186 = vmatprep.subr.bf16.mxu0 0
    %2187 = vmatpush1.bf16.msra.mxu0 %v1884
    %2188 = vmatprep.subr.bf16.mxu0 0
    %2189 = vmatpush1.bf16.msra.mxu0 %v1883
    %2190 = vmatprep.subr.bf16.mxu0 0
    %2191 = vmatpush1.bf16.msra.mxu0 %v1882
    %2192 = vmatprep.subr.bf16.mxu0 0
    %2193 = vmatpush1.bf16.msra.mxu0 %v1881
    %2194 = vmatprep.subr.bf16.mxu0 0
    %2195 = vmatpush1.bf16.msra.mxu0 %v1880
    %2196 = vmatprep.subr.bf16.mxu0 0
    %2197 = vmatpush1.bf16.msra.mxu0 %v1879
    %2198 = vmatprep.subr.bf16.mxu0 0
    %2199 = vmatpush1.bf16.msra.mxu0 %v1878
    %2200 = vmatprep.subr.bf16.mxu0 0
    %2201 = vmatpush2.bf16.msra.mxu0 %v1893
    %2202 = vmatprep.subr.bf16.mxu0 0
    %2203 = vmatpush2.bf16.msra.mxu0 %v1892
    %2204 = vmatprep.subr.bf16.mxu0 0
    %2205 = vmatpush2.bf16.msra.mxu0 %v1891
    %2206 = vmatprep.subr.bf16.mxu0 0
    %2207 = vmatpush2.bf16.msra.mxu0 %v1890
    %2208 = vmatprep.subr.bf16.mxu0 0
    %2209 = vmatpush2.bf16.msra.mxu0 %v1889
    %2210 = vmatprep.subr.bf16.mxu0 0
    %2211 = vmatpush2.bf16.msra.mxu0 %v1888
    %2212 = vmatprep.subr.bf16.mxu0 0
    %2213 = vmatpush2.bf16.msra.mxu0 %v1887
    %2214 = vmatprep.subr.bf16.mxu0 0
    %2215 = vmatpush2.bf16.msra.mxu0 %v1886
    %2216 = vmatprep.mubr.bf16.mxu0 %v1036
    %2217 = vmatmul.mubr.bf16.gmra.mxu0 %v915
    %v2218 = vpop.f32.mrf.mxu0
    %v2219 = vadd.f32 %v2122, %v2218
    %v2220 = vpop.f32.mrf.mxu0
    %v2221 = vpop.f32.mrf.mxu0
    %v2222 = vadd.f32 %v2125, %v2221
    %v2223 = vpop.f32.mrf.mxu0
    %2224 = vmatprep.mubr.bf16.mxu0 %v1037
    %2225 = vmatmul.mubr.bf16.gmra.mxu0 %v916
    %v2226 = vpop.f32.mrf.mxu0
    %v2227 = vadd.f32 %v2130, %v2226
    %v2228 = vpop.f32.mrf.mxu0
    %v2229 = vpop.f32.mrf.mxu0
    %v2230 = vadd.f32 %v2133, %v2229
    %v2231 = vpop.f32.mrf.mxu0
    %2232 = vmatprep.mubr.bf16.mxu0 %v1038
    %2233 = vmatmul.mubr.bf16.gmra.mxu0 %v917
    %v2234 = vpop.f32.mrf.mxu0
    %v2235 = vadd.f32 %v2138, %v2234
    %v2236 = vpop.f32.mrf.mxu0
    %v2237 = vpop.f32.mrf.mxu0
    %v2238 = vadd.f32 %v2141, %v2237
    %v2239 = vpop.f32.mrf.mxu0
    %2240 = vmatprep.mubr.bf16.mxu0 %v1039
    %2241 = vmatmul.mubr.bf16.gmra.mxu0 %v918
    %v2242 = vpop.f32.mrf.mxu0
    %v2243 = vadd.f32 %v2146, %v2242
    %v2244 = vpop.f32.mrf.mxu0
    %v2245 = vpop.f32.mrf.mxu0
    %v2246 = vadd.f32 %v2149, %v2245
    %v2247 = vpop.f32.mrf.mxu0
    %2248 = vmatprep.mubr.bf16.mxu0 %v1040
    %2249 = vmatmul.mubr.bf16.gmra.mxu0 %v919
    %v2250 = vpop.f32.mrf.mxu0
    %v2251 = vadd.f32 %v2154, %v2250
    %v2252 = vpop.f32.mrf.mxu0
    %v2253 = vpop.f32.mrf.mxu0
    %v2254 = vadd.f32 %v2157, %v2253
    %v2255 = vpop.f32.mrf.mxu0
    %2256 = vmatprep.mubr.bf16.mxu0 %v1041
    %2257 = vmatmul.mubr.bf16.gmra.mxu0 %v920
    %v2258 = vpop.f32.mrf.mxu0
    %v2259 = vadd.f32 %v2162, %v2258
    %v2260 = vpop.f32.mrf.mxu0
    %v2261 = vpop.f32.mrf.mxu0
    %v2262 = vadd.f32 %v2165, %v2261
    %v2263 = vpop.f32.mrf.mxu0
    %2264 = vmatprep.mubr.bf16.mxu0 %v1042
    %2265 = vmatmul.mubr.bf16.gmra.mxu0 %v921
    %v2266 = vpop.f32.mrf.mxu0
    %v2267 = vadd.f32 %v2170, %v2266
    %v2268 = vpop.f32.mrf.mxu0
    %v2269 = vpop.f32.mrf.mxu0
    %v2270 = vadd.f32 %v2173, %v2269
    %v2271 = vpop.f32.mrf.mxu0
    %2272 = vmatprep.mubr.bf16.mxu0 %v1043
    %2273 = vmatmul.mubr.bf16.gmra.mxu0 %v922
    %v2274 = vpop.f32.mrf.mxu0
    %v2275 = vadd.f32 %v2178, %v2274
    %v2276 = vpop.f32.mrf.mxu0
    %v2277 = vpop.f32.mrf.mxu0
    %v2278 = vadd.f32 %v2181, %v2277
    %v2279 = vpop.f32.mrf.mxu0
    %2280 = vdwg.mxu0
    %2281 = vmatprep.subr.bf16.mxu0 0
    %2282 = vmatpush1.bf16.msra.mxu0 %v1901
    %2283 = vmatprep.subr.bf16.mxu0 0
    %2284 = vmatpush1.bf16.msra.mxu0 %v1900
    %2285 = vmatprep.subr.bf16.mxu0 0
    %2286 = vmatpush1.bf16.msra.mxu0 %v1899
    %2287 = vmatprep.subr.bf16.mxu0 0
    %2288 = vmatpush1.bf16.msra.mxu0 %v1898
    %2289 = vmatprep.subr.bf16.mxu0 0
    %2290 = vmatpush1.bf16.msra.mxu0 %v1897
    %2291 = vmatprep.subr.bf16.mxu0 0
    %2292 = vmatpush1.bf16.msra.mxu0 %v1896
    %2293 = vmatprep.subr.bf16.mxu0 0
    %2294 = vmatpush1.bf16.msra.mxu0 %v1895
    %2295 = vmatprep.subr.bf16.mxu0 0
    %2296 = vmatpush1.bf16.msra.mxu0 %v1894
    %2297 = vmatprep.subr.bf16.mxu0 0
    %2298 = vmatpush2.bf16.msra.mxu0 %v1909
    %2299 = vmatprep.subr.bf16.mxu0 0
    %2300 = vmatpush2.bf16.msra.mxu0 %v1908
    %2301 = vmatprep.subr.bf16.mxu0 0
    %2302 = vmatpush2.bf16.msra.mxu0 %v1907
    %2303 = vmatprep.subr.bf16.mxu0 0
    %2304 = vmatpush2.bf16.msra.mxu0 %v1906
    %2305 = vmatprep.subr.bf16.mxu0 0
    %2306 = vmatpush2.bf16.msra.mxu0 %v1905
    %2307 = vmatprep.subr.bf16.mxu0 0
    %2308 = vmatpush2.bf16.msra.mxu0 %v1904
    %2309 = vmatprep.subr.bf16.mxu0 0
    %2310 = vmatpush2.bf16.msra.mxu0 %v1903
    %2311 = vmatprep.subr.bf16.mxu0 0
    %2312 = vmatpush2.bf16.msra.mxu0 %v1902
    %2313 = vmatprep.mubr.bf16.mxu0 %v1278
    %2314 = vmatmul.mubr.bf16.gmra.mxu0 %v1157
    %v2315 = vpop.f32.mrf.mxu0
    %v2316 = vadd.f32 %v2219, %v2315
    %v2317 = vpop.f32.mrf.mxu0
    %v2318 = vpop.f32.mrf.mxu0
    %v2319 = vadd.f32 %v2222, %v2318
    %v2320 = vpop.f32.mrf.mxu0
    %2321 = vmatprep.mubr.bf16.mxu0 %v1279
    %2322 = vmatmul.mubr.bf16.gmra.mxu0 %v1158
    %v2323 = vpop.f32.mrf.mxu0
    %v2324 = vadd.f32 %v2227, %v2323
    %v2325 = vpop.f32.mrf.mxu0
    %v2326 = vpop.f32.mrf.mxu0
    %v2327 = vadd.f32 %v2230, %v2326
    %v2328 = vpop.f32.mrf.mxu0
    %2329 = vmatprep.mubr.bf16.mxu0 %v1280
    %2330 = vmatmul.mubr.bf16.gmra.mxu0 %v1159
    %v2331 = vpop.f32.mrf.mxu0
    %v2332 = vadd.f32 %v2235, %v2331
    %v2333 = vpop.f32.mrf.mxu0
    %v2334 = vpop.f32.mrf.mxu0
    %v2335 = vadd.f32 %v2238, %v2334
    %v2336 = vpop.f32.mrf.mxu0
    %2337 = vmatprep.mubr.bf16.mxu0 %v1281
    %2338 = vmatmul.mubr.bf16.gmra.mxu0 %v1160
    %v2339 = vpop.f32.mrf.mxu0
    %v2340 = vadd.f32 %v2243, %v2339
    %v2341 = vpop.f32.mrf.mxu0
    %v2342 = vpop.f32.mrf.mxu0
    %v2343 = vadd.f32 %v2246, %v2342
    %v2344 = vpop.f32.mrf.mxu0
    %2345 = vmatprep.mubr.bf16.mxu0 %v1282
    %2346 = vmatmul.mubr.bf16.gmra.mxu0 %v1161
    %v2347 = vpop.f32.mrf.mxu0
    %v2348 = vadd.f32 %v2251, %v2347
    %v2349 = vpop.f32.mrf.mxu0
    %v2350 = vpop.f32.mrf.mxu0
    %v2351 = vadd.f32 %v2254, %v2350
    %v2352 = vpop.f32.mrf.mxu0
    %2353 = vmatprep.mubr.bf16.mxu0 %v1283
    %2354 = vmatmul.mubr.bf16.gmra.mxu0 %v1162
    %v2355 = vpop.f32.mrf.mxu0
    %v2356 = vadd.f32 %v2259, %v2355
    %v2357 = vpop.f32.mrf.mxu0
    %v2358 = vpop.f32.mrf.mxu0
    %v2359 = vadd.f32 %v2262, %v2358
    %v2360 = vpop.f32.mrf.mxu0
    %2361 = vmatprep.mubr.bf16.mxu0 %v1284
    %2362 = vmatmul.mubr.bf16.gmra.mxu0 %v1163
    %v2363 = vpop.f32.mrf.mxu0
    %v2364 = vadd.f32 %v2267, %v2363
    %v2365 = vpop.f32.mrf.mxu0
    %v2366 = vpop.f32.mrf.mxu0
    %v2367 = vadd.f32 %v2270, %v2366
    %v2368 = vpop.f32.mrf.mxu0
    %2369 = vmatprep.mubr.bf16.mxu0 %v1285
    %2370 = vmatmul.mubr.bf16.gmra.mxu0 %v1164
    %v2371 = vpop.f32.mrf.mxu0
    %v2372 = vadd.f32 %v2275, %v2371
    %v2373 = vpop.f32.mrf.mxu0
    %v2374 = vpop.f32.mrf.mxu0
    %v2375 = vadd.f32 %v2278, %v2374
    %v2376 = vpop.f32.mrf.mxu0
    %2377 = vdwg.mxu0
    %2378 = vmatprep.subr.bf16.mxu0 0
    %2379 = vmatpush1.bf16.msra.mxu0 %v1917
    %2380 = vmatprep.subr.bf16.mxu0 0
    %2381 = vmatpush1.bf16.msra.mxu0 %v1916
    %2382 = vmatprep.subr.bf16.mxu0 0
    %2383 = vmatpush1.bf16.msra.mxu0 %v1915
    %2384 = vmatprep.subr.bf16.mxu0 0
    %2385 = vmatpush1.bf16.msra.mxu0 %v1914
    %2386 = vmatprep.subr.bf16.mxu0 0
    %2387 = vmatpush1.bf16.msra.mxu0 %v1913
    %2388 = vmatprep.subr.bf16.mxu0 0
    %2389 = vmatpush1.bf16.msra.mxu0 %v1912
    %2390 = vmatprep.subr.bf16.mxu0 0
    %2391 = vmatpush1.bf16.msra.mxu0 %v1911
    %2392 = vmatprep.subr.bf16.mxu0 0
    %2393 = vmatpush1.bf16.msra.mxu0 %v1910
    %2394 = vmatprep.subr.bf16.mxu0 0
    %2395 = vmatpush2.bf16.msra.mxu0 0
    %2396 = vmatprep.subr.bf16.mxu0 0
    %2397 = vmatpush2.bf16.msra.mxu0 0
    %2398 = vmatprep.subr.bf16.mxu0 0
    %2399 = vmatpush2.bf16.msra.mxu0 0
    %2400 = vmatprep.subr.bf16.mxu0 0
    %2401 = vmatpush2.bf16.msra.mxu0 0
    %2402 = vmatprep.subr.bf16.mxu0 0
    %2403 = vmatpush2.bf16.msra.mxu0 0
    %2404 = vmatprep.subr.bf16.mxu0 0
    %2405 = vmatpush2.bf16.msra.mxu0 0
    %2406 = vmatprep.subr.bf16.mxu0 0
    %2407 = vmatpush2.bf16.msra.mxu0 0
    %2408 = vmatprep.subr.bf16.mxu0 0
    %2409 = vmatpush2.bf16.msra.mxu0 0
    %2410 = vmatprep.mubr.bf16.mxu0 0
    %2411 = vmatmul.mubr.bf16.gmra.mxu0 %v1399
    %v2412 = vpop.f32.mrf.mxu0
    %v2413 = vadd.f32 %v2316, %v2412
    %v2414 = vpop.f32.mrf.mxu0
    %v2415 = vpop.f32.mrf.mxu0
    %v2416 = vadd.f32 %v2319, %v2415
    %v2417 = vpop.f32.mrf.mxu0
    %2418 = vmatprep.mubr.bf16.mxu0 0
    %2419 = vmatmul.mubr.bf16.gmra.mxu0 %v1400
    %v2420 = vpop.f32.mrf.mxu0
    %v2421 = vadd.f32 %v2324, %v2420
    %v2422 = vpop.f32.mrf.mxu0
    %v2423 = vpop.f32.mrf.mxu0
    %v2424 = vadd.f32 %v2327, %v2423
    %v2425 = vpop.f32.mrf.mxu0
    %2426 = vmatprep.mubr.bf16.mxu0 0
    %2427 = vmatmul.mubr.bf16.gmra.mxu0 %v1401
    %v2428 = vpop.f32.mrf.mxu0
    %v2429 = vadd.f32 %v2332, %v2428
    %v2430 = vpop.f32.mrf.mxu0
    %v2431 = vpop.f32.mrf.mxu0
    %v2432 = vadd.f32 %v2335, %v2431
    %v2433 = vpop.f32.mrf.mxu0
    %2434 = vmatprep.mubr.bf16.mxu0 0
    %2435 = vmatmul.mubr.bf16.gmra.mxu0 %v1402
    %v2436 = vpop.f32.mrf.mxu0
    %v2437 = vadd.f32 %v2340, %v2436
    %v2438 = vpop.f32.mrf.mxu0
    %v2439 = vpop.f32.mrf.mxu0
    %v2440 = vadd.f32 %v2343, %v2439
    %v2441 = vpop.f32.mrf.mxu0
    %2442 = vmatprep.mubr.bf16.mxu0 0
    %2443 = vmatmul.mubr.bf16.gmra.mxu0 %v1403
    %v2444 = vpop.f32.mrf.mxu0
    %v2445 = vadd.f32 %v2348, %v2444
    %v2446 = vpop.f32.mrf.mxu0
    %v2447 = vpop.f32.mrf.mxu0
    %v2448 = vadd.f32 %v2351, %v2447
    %v2449 = vpop.f32.mrf.mxu0
    %2450 = vmatprep.mubr.bf16.mxu0 0
    %2451 = vmatmul.mubr.bf16.gmra.mxu0 %v1404
    %v2452 = vpop.f32.mrf.mxu0
    %v2453 = vadd.f32 %v2356, %v2452
    %v2454 = vpop.f32.mrf.mxu0
    %v2455 = vpop.f32.mrf.mxu0
    %v2456 = vadd.f32 %v2359, %v2455
    %v2457 = vpop.f32.mrf.mxu0
    %2458 = vmatprep.mubr.bf16.mxu0 0
    %2459 = vmatmul.mubr.bf16.gmra.mxu0 %v1405
    %v2460 = vpop.f32.mrf.mxu0
    %v2461 = vadd.f32 %v2364, %v2460
    %v2462 = vpop.f32.mrf.mxu0
    %v2463 = vpop.f32.mrf.mxu0
    %v2464 = vadd.f32 %v2367, %v2463
    %v2465 = vpop.f32.mrf.mxu0
    %2466 = vmatprep.mubr.bf16.mxu0 0
    %2467 = vmatmul.mubr.bf16.gmra.mxu0 %v1406
    %v2468 = vpop.f32.mrf.mxu0
    %v2469 = vadd.f32 %v2372, %v2468
    %v2470 = vpop.f32.mrf.mxu0
    %v2471 = vpop.f32.mrf.mxu0
    %v2472 = vadd.f32 %v2375, %v2471
    %v2473 = vpop.f32.mrf.mxu0
    %2474 = vdwg.mxu0
    %v2475 = vmax.f32 %v2413, 0.0
    %v2476 = vmax.f32 %v2416, 0.0
    %v2477 = vmax.f32 %v2421, 0.0
    %v2478 = vmax.f32 %v2424, 0.0
    %v2479 = vmax.f32 %v2429, 0.0
    %v2480 = vmax.f32 %v2432, 0.0
    %v2481 = vmax.f32 %v2437, 0.0
    %v2482 = vmax.f32 %v2440, 0.0
    %v2483 = vmax.f32 %v2445, 0.0
    %v2484 = vmax.f32 %v2448, 0.0
    %v2485 = vmax.f32 %v2453, 0.0
    %v2486 = vmax.f32 %v2456, 0.0
    %v2487 = vmax.f32 %v2461, 0.0
    %v2488 = vmax.f32 %v2464, 0.0
    %v2489 = vmax.f32 %v2469, 0.0
    %v2490 = vmax.f32 %v2472, 0.0
    %v2491 = vpack.c.bf16 %v2476, %v2475
    %v2492 = vpack.c.bf16 %v2478, %v2477
    %v2493 = vpack.c.bf16 %v2480, %v2479
    %v2494 = vpack.c.bf16 %v2482, %v2481
    %v2495 = vpack.c.bf16 %v2484, %v2483
    %v2496 = vpack.c.bf16 %v2486, %v2485
    %v2497 = vpack.c.bf16 %v2488, %v2487
    %v2498 = vpack.c.bf16 %v2490, %v2489
    %v2499 = vld [vmem:[%s8] sm:$0xf]
    %v2500 = vld [vmem:[%s8 + $0x4] sm:$0xf]
    %v2501 = vld [vmem:[%s8 + $0x8] sm:$0xf]
    %v2502 = vld [vmem:[%s8 + $0xc] sm:$0xf]
    %v2503 = vld [vmem:[%s8 + $0x10] sm:$0xf]
    %v2504 = vld [vmem:[%s8 + $0x14] sm:$0xf]
    %v2505 = vld [vmem:[%s8 + $0x18] sm:$0xf]
    %v2506 = vld [vmem:[%s8 + $0x1c] sm:$0xf]
    %v2507 = vld [vmem:[%s8 + $0x20] sm:$0xf]
    %v2508 = vld [vmem:[%s8 + $0x24] sm:$0xf]
    %v2509 = vld [vmem:[%s8 + $0x28] sm:$0xf]
    %v2510 = vld [vmem:[%s8 + $0x2c] sm:$0xf]
    %v2511 = vld [vmem:[%s8 + $0x30] sm:$0xf]
    %v2512 = vld [vmem:[%s8 + $0x34] sm:$0xf]
    %v2513 = vld [vmem:[%s8 + $0x38] sm:$0xf]
    %v2514 = vld [vmem:[%s8 + $0x3c] sm:$0xf]
    %v2515 = vld [vmem:[%s9] sm:$0x1]
    %v2517 = vlaneseq
    %v2518 = vshrl.u32 %v2517, 7
    %v2519 = vsub.s32 0, %v2518
    %v2520 = vrot.slane %v2515, %v2519
    %v2538 = vunpack.c.l.b16 %v2499
    %v2539 = vunpack.c.l.b16 %v2500
    %v2540 = vunpack.c.l.b16 %v2501
    %v2541 = vunpack.c.l.b16 %v2502
    %v2542 = vunpack.c.l.b16 %v2503
    %v2543 = vunpack.c.l.b16 %v2504
    %v2544 = vunpack.c.l.b16 %v2505
    %v2545 = vunpack.c.l.b16 %v2506
    %v2546 = vunpack.c.l.b16 %v2507
    %v2547 = vunpack.c.l.b16 %v2508
    %v2548 = vunpack.c.l.b16 %v2509
    %v2549 = vunpack.c.l.b16 %v2510
    %v2550 = vunpack.c.l.b16 %v2511
    %v2551 = vunpack.c.l.b16 %v2512
    %v2552 = vunpack.c.l.b16 %v2513
    %v2553 = vunpack.c.l.b16 %v2514
    %v2554 = vpack.c.b16 %v2539, %v2538
    %v2555 = vpack.c.b16 %v2541, %v2540
    %v2556 = vpack.c.b16 %v2543, %v2542
    %v2557 = vpack.c.b16 %v2545, %v2544
    %v2558 = vpack.c.b16 %v2547, %v2546
    %v2559 = vpack.c.b16 %v2549, %v2548
    %v2560 = vpack.c.b16 %v2551, %v2550
    %v2561 = vpack.c.b16 %v2553, %v2552
    %2570 = vmatprep.subr.bf16.mxu0 0
    %2571 = vmatpush1.bf16.msra.mxu0 %v2561
    %2572 = vmatprep.subr.bf16.mxu0 0
    %2573 = vmatpush1.bf16.msra.mxu0 %v2560
    %2574 = vmatprep.subr.bf16.mxu0 0
    %2575 = vmatpush1.bf16.msra.mxu0 %v2559
    %2576 = vmatprep.subr.bf16.mxu0 0
    %2577 = vmatpush1.bf16.msra.mxu0 %v2558
    %2578 = vmatprep.subr.bf16.mxu0 0
    %2579 = vmatpush1.bf16.msra.mxu0 %v2557
    %2580 = vmatprep.subr.bf16.mxu0 0
    %2581 = vmatpush1.bf16.msra.mxu0 %v2556
    %2582 = vmatprep.subr.bf16.mxu0 0
    %2583 = vmatpush1.bf16.msra.mxu0 %v2555
    %2584 = vmatprep.subr.bf16.mxu0 0
    %2585 = vmatpush1.bf16.msra.mxu0 %v2554
    %2586 = vmatprep.subr.bf16.mxu0 0
    %2587 = vmatpush2.bf16.msra.mxu0 0
    %2588 = vmatprep.subr.bf16.mxu0 0
    %2589 = vmatpush2.bf16.msra.mxu0 0
    %2590 = vmatprep.subr.bf16.mxu0 0
    %2591 = vmatpush2.bf16.msra.mxu0 0
    %2592 = vmatprep.subr.bf16.mxu0 0
    %2593 = vmatpush2.bf16.msra.mxu0 0
    %2594 = vmatprep.subr.bf16.mxu0 0
    %2595 = vmatpush2.bf16.msra.mxu0 0
    %2596 = vmatprep.subr.bf16.mxu0 0
    %2597 = vmatpush2.bf16.msra.mxu0 0
    %2598 = vmatprep.subr.bf16.mxu0 0
    %2599 = vmatpush2.bf16.msra.mxu0 0
    %2600 = vmatprep.subr.bf16.mxu0 0
    %2601 = vmatpush2.bf16.msra.mxu0 0
    %2602 = vmatprep.mubr.bf16.mxu0 0
    %2603 = vmatmul.mubr.bf16.gmra.mxu0 %v2491
    %v2604 = vpop.f32.mrf.mxu0
    %v2605 = vadd.f32 %v2520, %v2604
    %v2606 = vpop.f32.mrf.mxu0
    %v2607 = vpop.f32.mrf.mxu0
    %v2608 = vadd.f32 %v2520, %v2607
    %v2609 = vpop.f32.mrf.mxu0
    %2610 = vmatprep.mubr.bf16.mxu0 0
    %2611 = vmatmul.mubr.bf16.gmra.mxu0 %v2492
    %v2612 = vpop.f32.mrf.mxu0
    %v2613 = vadd.f32 %v2520, %v2612
    %v2614 = vpop.f32.mrf.mxu0
    %v2615 = vpop.f32.mrf.mxu0
    %v2616 = vadd.f32 %v2520, %v2615
    %v2617 = vpop.f32.mrf.mxu0
    %2618 = vmatprep.mubr.bf16.mxu0 0
    %2619 = vmatmul.mubr.bf16.gmra.mxu0 %v2493
    %v2620 = vpop.f32.mrf.mxu0
    %v2621 = vadd.f32 %v2520, %v2620
    %v2622 = vpop.f32.mrf.mxu0
    %v2623 = vpop.f32.mrf.mxu0
    %v2624 = vadd.f32 %v2520, %v2623
    %v2625 = vpop.f32.mrf.mxu0
    %2626 = vmatprep.mubr.bf16.mxu0 0
    %2627 = vmatmul.mubr.bf16.gmra.mxu0 %v2494
    %v2628 = vpop.f32.mrf.mxu0
    %v2629 = vadd.f32 %v2520, %v2628
    %v2630 = vpop.f32.mrf.mxu0
    %v2631 = vpop.f32.mrf.mxu0
    %v2632 = vadd.f32 %v2520, %v2631
    %v2633 = vpop.f32.mrf.mxu0
    %2634 = vmatprep.mubr.bf16.mxu0 0
    %2635 = vmatmul.mubr.bf16.gmra.mxu0 %v2495
    %v2636 = vpop.f32.mrf.mxu0
    %v2637 = vadd.f32 %v2520, %v2636
    %v2638 = vpop.f32.mrf.mxu0
    %v2639 = vpop.f32.mrf.mxu0
    %v2640 = vadd.f32 %v2520, %v2639
    %v2641 = vpop.f32.mrf.mxu0
    %2642 = vmatprep.mubr.bf16.mxu0 0
    %2643 = vmatmul.mubr.bf16.gmra.mxu0 %v2496
    %v2644 = vpop.f32.mrf.mxu0
    %v2645 = vadd.f32 %v2520, %v2644
    %v2646 = vpop.f32.mrf.mxu0
    %v2647 = vpop.f32.mrf.mxu0
    %v2648 = vadd.f32 %v2520, %v2647
    %v2649 = vpop.f32.mrf.mxu0
    %2650 = vmatprep.mubr.bf16.mxu0 0
    %2651 = vmatmul.mubr.bf16.gmra.mxu0 %v2497
    %v2652 = vpop.f32.mrf.mxu0
    %v2653 = vadd.f32 %v2520, %v2652
    %v2654 = vpop.f32.mrf.mxu0
    %v2655 = vpop.f32.mrf.mxu0
    %v2656 = vadd.f32 %v2520, %v2655
    %v2657 = vpop.f32.mrf.mxu0
    %2658 = vmatprep.mubr.bf16.mxu0 0
    %2659 = vmatmul.mubr.bf16.gmra.mxu0 %v2498
    %v2660 = vpop.f32.mrf.mxu0
    %v2661 = vadd.f32 %v2520, %v2660
    %v2662 = vpop.f32.mrf.mxu0
    %v2663 = vpop.f32.mrf.mxu0
    %v2664 = vadd.f32 %v2520, %v2663
    %v2665 = vpop.f32.mrf.mxu0
    %2666 = vdwg.mxu0
    %v2667 = vld [vmem:[%s2] sm:$0x3]
    %2668 = vmatprep.subr.mxu0 0.0
    %2669 = vmatpush1.msra.mxu0 %v2664
    %2670 = vmatprep.subr.mxu0 0.0
    %2671 = vmatpush1.msra.mxu0 %v2661
    %2672 = vmatprep.subr.mxu0 0.0
    %2673 = vmatpush1.msra.mxu0 %v2656
    %2674 = vmatprep.subr.mxu0 0.0
    %2675 = vmatpush1.msra.mxu0 %v2653
    %2676 = vmatprep.subr.mxu0 0.0
    %2677 = vmatpush1.msra.mxu0 %v2648
    %2678 = vmatprep.subr.mxu0 0.0
    %2679 = vmatpush1.msra.mxu0 %v2645
    %2680 = vmatprep.subr.mxu0 0.0
    %2681 = vmatpush1.msra.mxu0 %v2640
    %2682 = vmatprep.subr.mxu0 0.0
    %2683 = vmatpush1.msra.mxu0 %v2637
    %2684 = vmatprep.subr.mxu0 0.0
    %2685 = vmatpush1.msra.mxu0 %v2632
    %2686 = vmatprep.subr.mxu0 0.0
    %2687 = vmatpush1.msra.mxu0 %v2629
    %2688 = vmatprep.subr.mxu0 0.0
    %2689 = vmatpush1.msra.mxu0 %v2624
    %2690 = vmatprep.subr.mxu0 0.0
    %2691 = vmatpush1.msra.mxu0 %v2621
    %2692 = vmatprep.subr.mxu0 0.0
    %2693 = vmatpush1.msra.mxu0 %v2616
    %2694 = vmatprep.subr.mxu0 0.0
    %2695 = vmatpush1.msra.mxu0 %v2613
    %2696 = vmatprep.subr.mxu0 0.0
    %2697 = vmatpush1.msra.mxu0 %v2608
    %2698 = vmatprep.subr.mxu0 0.0
    %2699 = vmatpush1.msra.mxu0 %v2605
    %2700 = vmatprep.subr.mxu0 0.0
    %2701 = vmatpush2.msra.mxu0 0.0
    %2702 = vmatprep.subr.mxu0 0.0
    %2703 = vmatpush2.msra.mxu0 0.0
    %2704 = vmatprep.subr.mxu0 0.0
    %2705 = vmatpush2.msra.mxu0 0.0
    %2706 = vmatprep.subr.mxu0 0.0
    %2707 = vmatpush2.msra.mxu0 0.0
    %2708 = vmatprep.subr.mxu0 0.0
    %2709 = vmatpush2.msra.mxu0 0.0
    %2710 = vmatprep.subr.mxu0 0.0
    %2711 = vmatpush2.msra.mxu0 0.0
    %2712 = vmatprep.subr.mxu0 0.0
    %2713 = vmatpush2.msra.mxu0 0.0
    %2714 = vmatprep.subr.mxu0 0.0
    %2715 = vmatpush2.msra.mxu0 0.0
    %2716 = vmatprep.subr.mxu0 0.0
    %2717 = vmatpush2.msra.mxu0 0.0
    %2718 = vmatprep.subr.mxu0 0.0
    %2719 = vmatpush2.msra.mxu0 0.0
    %2720 = vmatprep.subr.mxu0 0.0
    %2721 = vmatpush2.msra.mxu0 0.0
    %2722 = vmatprep.subr.mxu0 0.0
    %2723 = vmatpush2.msra.mxu0 0.0
    %2724 = vmatprep.subr.mxu0 0.0
    %2725 = vmatpush2.msra.mxu0 0.0
    %2726 = vmatprep.subr.mxu0 0.0
    %2727 = vmatpush2.msra.mxu0 0.0
    %2728 = vmatprep.subr.mxu0 0.0
    %2729 = vmatpush2.msra.mxu0 0.0
    %2730 = vmatprep.subr.mxu0 0.0
    %2731 = vmatpush2.msra.mxu0 0.0
    %2732 = vmatprep.mubr.f32.mxu0 0.0
    %2733 = vmatmul.mubr.f32.gmra.mxu0 %v2667
    %v2734 = vpop.f32.mrf.mxu0
    %v2735 = vadd.f32 0.0, %v2734
    %v2736 = vpop.f32.mrf.mxu0
    %2737 = vdwg.mxu0
    %v2738 = vpack.c.bf16 %v2735, %v2735
    %v2739 = vld [vmem:[%s10] sm:$0xf]
    %v2740 = vld [vmem:[%s10 + $0x4] sm:$0xf]
    %v2741 = vld [vmem:[%s10 + $0x8] sm:$0xf]
    %v2742 = vld [vmem:[%s10 + $0xc] sm:$0xf]
    %v2743 = vld [vmem:[%s10 + $0x10] sm:$0xf]
    %v2744 = vld [vmem:[%s10 + $0x14] sm:$0xf]
    %v2745 = vld [vmem:[%s10 + $0x18] sm:$0xf]
    %v2746 = vld [vmem:[%s10 + $0x1c] sm:$0xf]
    %v2747 = vld [vmem:[%s10 + $0x20] sm:$0xf]
    %v2748 = vld [vmem:[%s10 + $0x24] sm:$0xf]
    %v2749 = vld [vmem:[%s10 + $0x28] sm:$0xf]
    %v2750 = vld [vmem:[%s10 + $0x2c] sm:$0xf]
    %v2751 = vld [vmem:[%s10 + $0x30] sm:$0xf]
    %v2752 = vld [vmem:[%s10 + $0x34] sm:$0xf]
    %v2753 = vld [vmem:[%s10 + $0x38] sm:$0xf]
    %v2754 = vld [vmem:[%s10 + $0x3c] sm:$0xf]
    %v2771 = vunpack.c.l.b16 %v2739
    %v2772 = vunpack.c.l.b16 %v2740
    %v2773 = vunpack.c.l.b16 %v2741
    %v2774 = vunpack.c.l.b16 %v2742
    %v2775 = vunpack.c.l.b16 %v2743
    %v2776 = vunpack.c.l.b16 %v2744
    %v2777 = vunpack.c.l.b16 %v2745
    %v2778 = vunpack.c.l.b16 %v2746
    %v2779 = vunpack.c.l.b16 %v2747
    %v2780 = vunpack.c.l.b16 %v2748
    %v2781 = vunpack.c.l.b16 %v2749
    %v2782 = vunpack.c.l.b16 %v2750
    %v2783 = vunpack.c.l.b16 %v2751
    %v2784 = vunpack.c.l.b16 %v2752
    %v2785 = vunpack.c.l.b16 %v2753
    %v2786 = vunpack.c.l.b16 %v2754
    %v2787 = vpack.c.b16 %v2772, %v2771
    %v2788 = vpack.c.b16 %v2774, %v2773
    %v2789 = vpack.c.b16 %v2776, %v2775
    %v2790 = vpack.c.b16 %v2778, %v2777
    %v2791 = vpack.c.b16 %v2780, %v2779
    %v2792 = vpack.c.b16 %v2782, %v2781
    %v2793 = vpack.c.b16 %v2784, %v2783
    %v2794 = vpack.c.b16 %v2786, %v2785
    %2803 = vmatprep.subr.bf16.mxu0 0
    %2804 = vmatpush1.bf16.msra.mxu0 %v2794
    %2805 = vmatprep.subr.bf16.mxu0 0
    %2806 = vmatpush1.bf16.msra.mxu0 %v2793
    %2807 = vmatprep.subr.bf16.mxu0 0
    %2808 = vmatpush1.bf16.msra.mxu0 %v2792
    %2809 = vmatprep.subr.bf16.mxu0 0
    %2810 = vmatpush1.bf16.msra.mxu0 %v2791
    %2811 = vmatprep.subr.bf16.mxu0 0
    %2812 = vmatpush1.bf16.msra.mxu0 %v2790
    %2813 = vmatprep.subr.bf16.mxu0 0
    %2814 = vmatpush1.bf16.msra.mxu0 %v2789
    %2815 = vmatprep.subr.bf16.mxu0 0
    %2816 = vmatpush1.bf16.msra.mxu0 %v2788
    %2817 = vmatprep.subr.bf16.mxu0 0
    %2818 = vmatpush1.bf16.msra.mxu0 %v2787
    %2819 = vmatprep.subr.bf16.mxu0 0
    %2820 = vmatpush2.bf16.msra.mxu0 0
    %2821 = vmatprep.subr.bf16.mxu0 0
    %2822 = vmatpush2.bf16.msra.mxu0 0
    %2823 = vmatprep.subr.bf16.mxu0 0
    %2824 = vmatpush2.bf16.msra.mxu0 0
    %2825 = vmatprep.subr.bf16.mxu0 0
    %2826 = vmatpush2.bf16.msra.mxu0 0
    %2827 = vmatprep.subr.bf16.mxu0 0
    %2828 = vmatpush2.bf16.msra.mxu0 0
    %2829 = vmatprep.subr.bf16.mxu0 0
    %2830 = vmatpush2.bf16.msra.mxu0 0
    %2831 = vmatprep.subr.bf16.mxu0 0
    %2832 = vmatpush2.bf16.msra.mxu0 0
    %2833 = vmatprep.subr.bf16.mxu0 0
    %2834 = vmatpush2.bf16.msra.mxu0 0
    %2835 = vmatprep.mubr.bf16.mxu0 0
    %2836 = vmatmul.mubr.bf16.gmra.mxu0 %v2738
    %v2837 = vpop.f32.mrf.mxu0
    %v2838 = vadd.f32 0.0, %v2837
    %v2839 = vpop.f32.mrf.mxu0
    %v2840 = vpop.f32.mrf.mxu0
    %v2841 = vpop.f32.mrf.mxu0
    %2842 = vdwg.mxu0
    %v2843 = vmax.f32 %v2838, 0.0
    %v2844 = vpack.c.bf16 %v2843, %v2843
    %v2845 = vld [vmem:[%s11] sm:$0xf]
    %v2846 = vld [vmem:[%s11 + $0x4] sm:$0xf]
    %v2847 = vld [vmem:[%s11 + $0x8] sm:$0xf]
    %v2848 = vld [vmem:[%s11 + $0xc] sm:$0xf]
    %v2849 = vld [vmem:[%s11 + $0x10] sm:$0xf]
    %v2850 = vld [vmem:[%s11 + $0x14] sm:$0xf]
    %v2851 = vld [vmem:[%s11 + $0x18] sm:$0xf]
    %v2852 = vld [vmem:[%s11 + $0x1c] sm:$0xf]
    %v2853 = vld [vmem:[%s11 + $0x20] sm:$0xf]
    %v2854 = vld [vmem:[%s11 + $0x24] sm:$0xf]
    %v2855 = vld [vmem:[%s11 + $0x28] sm:$0xf]
    %v2856 = vld [vmem:[%s11 + $0x2c] sm:$0xf]
    %v2857 = vld [vmem:[%s11 + $0x30] sm:$0xf]
    %v2858 = vld [vmem:[%s11 + $0x34] sm:$0xf]
    %v2859 = vld [vmem:[%s11 + $0x38] sm:$0xf]
    %v2860 = vld [vmem:[%s11 + $0x3c] sm:$0xf]
    %v2877 = vunpack.c.l.b16 %v2845
    %v2878 = vunpack.c.l.b16 %v2846
    %v2879 = vunpack.c.l.b16 %v2847
    %v2880 = vunpack.c.l.b16 %v2848
    %v2881 = vunpack.c.l.b16 %v2849
    %v2882 = vunpack.c.l.b16 %v2850
    %v2883 = vunpack.c.l.b16 %v2851
    %v2884 = vunpack.c.l.b16 %v2852
    %v2885 = vunpack.c.l.b16 %v2853
    %v2886 = vunpack.c.l.b16 %v2854
    %v2887 = vunpack.c.l.b16 %v2855
    %v2888 = vunpack.c.l.b16 %v2856
    %v2889 = vunpack.c.l.b16 %v2857
    %v2890 = vunpack.c.l.b16 %v2858
    %v2891 = vunpack.c.l.b16 %v2859
    %v2892 = vunpack.c.l.b16 %v2860
    %v2893 = vpack.c.b16 %v2878, %v2877
    %v2894 = vpack.c.b16 %v2880, %v2879
    %v2895 = vpack.c.b16 %v2882, %v2881
    %v2896 = vpack.c.b16 %v2884, %v2883
    %v2897 = vpack.c.b16 %v2886, %v2885
    %v2898 = vpack.c.b16 %v2888, %v2887
    %v2899 = vpack.c.b16 %v2890, %v2889
    %v2900 = vpack.c.b16 %v2892, %v2891
    %2909 = vmatprep.subr.bf16.mxu0 0
    %2910 = vmatpush1.bf16.msra.mxu0 %v2900
    %2911 = vmatprep.subr.bf16.mxu0 0
    %2912 = vmatpush1.bf16.msra.mxu0 %v2899
    %2913 = vmatprep.subr.bf16.mxu0 0
    %2914 = vmatpush1.bf16.msra.mxu0 %v2898
    %2915 = vmatprep.subr.bf16.mxu0 0
    %2916 = vmatpush1.bf16.msra.mxu0 %v2897
    %2917 = vmatprep.subr.bf16.mxu0 0
    %2918 = vmatpush1.bf16.msra.mxu0 %v2896
    %2919 = vmatprep.subr.bf16.mxu0 0
    %2920 = vmatpush1.bf16.msra.mxu0 %v2895
    %2921 = vmatprep.subr.bf16.mxu0 0
    %2922 = vmatpush1.bf16.msra.mxu0 %v2894
    %2923 = vmatprep.subr.bf16.mxu0 0
    %2924 = vmatpush1.bf16.msra.mxu0 %v2893
    %2925 = vmatprep.subr.bf16.mxu0 0
    %2926 = vmatpush2.bf16.msra.mxu0 0
    %2927 = vmatprep.subr.bf16.mxu0 0
    %2928 = vmatpush2.bf16.msra.mxu0 0
    %2929 = vmatprep.subr.bf16.mxu0 0
    %2930 = vmatpush2.bf16.msra.mxu0 0
    %2931 = vmatprep.subr.bf16.mxu0 0
    %2932 = vmatpush2.bf16.msra.mxu0 0
    %2933 = vmatprep.subr.bf16.mxu0 0
    %2934 = vmatpush2.bf16.msra.mxu0 0
    %2935 = vmatprep.subr.bf16.mxu0 0
    %2936 = vmatpush2.bf16.msra.mxu0 0
    %2937 = vmatprep.subr.bf16.mxu0 0
    %2938 = vmatpush2.bf16.msra.mxu0 0
    %2939 = vmatprep.subr.bf16.mxu0 0
    %2940 = vmatpush2.bf16.msra.mxu0 0
    %2941 = vmatprep.mubr.bf16.mxu0 0
    %2942 = vmatmul.mubr.bf16.gmra.mxu0 %v2844
    %v2943 = vpop.f32.mrf.mxu0
    %v2944 = vadd.f32 0.0, %v2943
    %v2945 = vpop.f32.mrf.mxu0
    %v2946 = vpop.f32.mrf.mxu0
    %v2947 = vpop.f32.mrf.mxu0
    %2948 = vdwg.mxu0
    %v2949 = vxor.u32 %v2944, 2147483648
    %v2950 = vmul.f32 %v2949, 1.442695
    %v2951 = vpow.pop %v2950
    %v2952 = vadd.f32 %v2951, 1.0
    %v2953 = vrcp.pop %v2952
    %v2954 = vmul.f32 1.0, %v2953
    %v2955 = vld [vmem:[%s3] sm:$0xff]
    %v2956 = vld [vmem:[%s3 + $0x8] sm:$0xff]
    %v2957 = vld [vmem:[%s3 + $0x10] sm:$0xff]
    %v2958 = vld [vmem:[%s3 + $0x18] sm:$0xff]
    %v2959 = vld [vmem:[%s3 + $0x20] sm:$0xff]
    %v2960 = vld [vmem:[%s3 + $0x28] sm:$0xff]
    %v2961 = vld [vmem:[%s3 + $0x30] sm:$0xff]
    %v2962 = vld [vmem:[%s3 + $0x38] sm:$0xff]
    %v2963 = vld [vmem:[%s3 + $0x40] sm:$0xff]
    %v2964 = vld [vmem:[%s3 + $0x48] sm:$0xff]
    %v2965 = vld [vmem:[%s3 + $0x50] sm:$0xff]
    %v2966 = vld [vmem:[%s3 + $0x58] sm:$0xff]
    %v2967 = vld [vmem:[%s3 + $0x60] sm:$0xff]
    %v2968 = vld [vmem:[%s3 + $0x68] sm:$0xff]
    %v2969 = vld [vmem:[%s3 + $0x70] sm:$0xff]
    %v2970 = vld [vmem:[%s3 + $0x78] sm:$0xff]
    %vm2971 = vcmask 15360
    %v2973 = vsel %vm2971, %v2955, 0
    %v2976 = vsel %vm2971, %v2956, 0
    %v2979 = vsel %vm2971, %v2957, 0
    %v2982 = vsel %vm2971, %v2958, 0
    %v2985 = vsel %vm2971, %v2959, 0
    %v2988 = vsel %vm2971, %v2960, 0
    %v2991 = vsel %vm2971, %v2961, 0
    %v2994 = vsel %vm2971, %v2962, 0
    %v2997 = vsel %vm2971, %v2963, 0
    %v3000 = vsel %vm2971, %v2964, 0
    %v3003 = vsel %vm2971, %v2965, 0
    %v3006 = vsel %vm2971, %v2966, 0
    %v3009 = vsel %vm2971, %v2967, 0
    %v3012 = vsel %vm2971, %v2968, 0
    %v3015 = vsel %vm2971, %v2969, 0
    %v3018 = vsel %vm2971, %v2970, 0
    %vm3020 = vcmask 1041408
    %v3022 = vsel %vm3020, %v2954, 0
    %3024 = vmatprep.subr.mxu0 0.0
    %3025 = vmatpush1.msra.mxu0 0.0
    %3026 = vmatprep.subr.mxu0 0.0
    %3027 = vmatpush1.msra.mxu0 0.0
    %3028 = vmatprep.subr.mxu0 0.0
    %3029 = vmatpush1.msra.mxu0 0.0
    %3030 = vmatprep.subr.mxu0 0.0
    %3031 = vmatpush1.msra.mxu0 0.0
    %3032 = vmatprep.subr.mxu0 0.0
    %3033 = vmatpush1.msra.mxu0 0.0
    %3034 = vmatprep.subr.mxu0 0.0
    %3035 = vmatpush1.msra.mxu0 0.0
    %3036 = vmatprep.subr.mxu0 0.0
    %3037 = vmatpush1.msra.mxu0 0.0
    %3038 = vmatprep.subr.mxu0 0.0
    %3039 = vmatpush1.msra.mxu0 0.0
    %3040 = vmatprep.subr.mxu0 0.0
    %3041 = vmatpush1.msra.mxu0 0.0
    %3042 = vmatprep.subr.mxu0 0.0
    %3043 = vmatpush1.msra.mxu0 0.0
    %3044 = vmatprep.subr.mxu0 0.0
    %3045 = vmatpush1.msra.mxu0 0.0
    %3046 = vmatprep.subr.mxu0 0.0
    %3047 = vmatpush1.msra.mxu0 0.0
    %3048 = vmatprep.subr.mxu0 0.0
    %3049 = vmatpush1.msra.mxu0 0.0
    %3050 = vmatprep.subr.mxu0 0.0
    %3051 = vmatpush1.msra.mxu0 0.0
    %3052 = vmatprep.subr.mxu0 0.0
    %3053 = vmatpush1.msra.mxu0 0.0
    %3054 = vmatprep.subr.mxu0 0.0
    %3055 = vmatpush1.msra.mxu0 %v3022
    %3056 = vmatprep.subr.mxu0 0.0
    %3057 = vmatpush2.msra.mxu0 0.0
    %3058 = vmatprep.subr.mxu0 0.0
    %3059 = vmatpush2.msra.mxu0 0.0
    %3060 = vmatprep.subr.mxu0 0.0
    %3061 = vmatpush2.msra.mxu0 0.0
    %3062 = vmatprep.subr.mxu0 0.0
    %3063 = vmatpush2.msra.mxu0 0.0
    %3064 = vmatprep.subr.mxu0 0.0
    %3065 = vmatpush2.msra.mxu0 0.0
    %3066 = vmatprep.subr.mxu0 0.0
    %3067 = vmatpush2.msra.mxu0 0.0
    %3068 = vmatprep.subr.mxu0 0.0
    %3069 = vmatpush2.msra.mxu0 0.0
    %3070 = vmatprep.subr.mxu0 0.0
    %3071 = vmatpush2.msra.mxu0 0.0
    %3072 = vmatprep.subr.mxu0 0.0
    %3073 = vmatpush2.msra.mxu0 0.0
    %3074 = vmatprep.subr.mxu0 0.0
    %3075 = vmatpush2.msra.mxu0 0.0
    %3076 = vmatprep.subr.mxu0 0.0
    %3077 = vmatpush2.msra.mxu0 0.0
    %3078 = vmatprep.subr.mxu0 0.0
    %3079 = vmatpush2.msra.mxu0 0.0
    %3080 = vmatprep.subr.mxu0 0.0
    %3081 = vmatpush2.msra.mxu0 0.0
    %3082 = vmatprep.subr.mxu0 0.0
    %3083 = vmatpush2.msra.mxu0 0.0
    %3084 = vmatprep.subr.mxu0 0.0
    %3085 = vmatpush2.msra.mxu0 0.0
    %3086 = vmatprep.subr.mxu0 0.0
    %3087 = vmatpush2.msra.mxu0 0.0
    %3088 = vmatprep.mubr.f32.mxu0 0.0
    %3089 = vmatmul.mubr.f32.gmra.mxu0 %v2973
    %v3090 = vpop.f32.mrf.mxu0
    %v3091 = vadd.f32 0.0, %v3090
    %v3092 = vpop.f32.mrf.mxu0
    %3093 = vmatprep.mubr.f32.mxu0 0.0
    %3094 = vmatmul.mubr.f32.gmra.mxu0 %v2976
    %v3095 = vpop.f32.mrf.mxu0
    %v3096 = vadd.f32 0.0, %v3095
    %v3097 = vpop.f32.mrf.mxu0
    %3098 = vmatprep.mubr.f32.mxu0 0.0
    %3099 = vmatmul.mubr.f32.gmra.mxu0 %v2979
    %v3100 = vpop.f32.mrf.mxu0
    %v3101 = vadd.f32 0.0, %v3100
    %v3102 = vpop.f32.mrf.mxu0
    %3103 = vmatprep.mubr.f32.mxu0 0.0
    %3104 = vmatmul.mubr.f32.gmra.mxu0 %v2982
    %v3105 = vpop.f32.mrf.mxu0
    %v3106 = vadd.f32 0.0, %v3105
    %v3107 = vpop.f32.mrf.mxu0
    %3108 = vmatprep.mubr.f32.mxu0 0.0
    %3109 = vmatmul.mubr.f32.gmra.mxu0 %v2985
    %v3110 = vpop.f32.mrf.mxu0
    %v3111 = vadd.f32 0.0, %v3110
    %v3112 = vpop.f32.mrf.mxu0
    %3113 = vmatprep.mubr.f32.mxu0 0.0
    %3114 = vmatmul.mubr.f32.gmra.mxu0 %v2988
    %v3115 = vpop.f32.mrf.mxu0
    %v3116 = vadd.f32 0.0, %v3115
    %v3117 = vpop.f32.mrf.mxu0
    %3118 = vmatprep.mubr.f32.mxu0 0.0
    %3119 = vmatmul.mubr.f32.gmra.mxu0 %v2991
    %v3120 = vpop.f32.mrf.mxu0
    %v3121 = vadd.f32 0.0, %v3120
    %v3122 = vpop.f32.mrf.mxu0
    %3123 = vmatprep.mubr.f32.mxu0 0.0
    %3124 = vmatmul.mubr.f32.gmra.mxu0 %v2994
    %v3125 = vpop.f32.mrf.mxu0
    %v3126 = vadd.f32 0.0, %v3125
    %v3127 = vpop.f32.mrf.mxu0
    %3128 = vmatprep.mubr.f32.mxu0 0.0
    %3129 = vmatmul.mubr.f32.gmra.mxu0 %v2997
    %v3130 = vpop.f32.mrf.mxu0
    %v3131 = vadd.f32 0.0, %v3130
    %v3132 = vpop.f32.mrf.mxu0
    %3133 = vmatprep.mubr.f32.mxu0 0.0
    %3134 = vmatmul.mubr.f32.gmra.mxu0 %v3000
    %v3135 = vpop.f32.mrf.mxu0
    %v3136 = vadd.f32 0.0, %v3135
    %v3137 = vpop.f32.mrf.mxu0
    %3138 = vmatprep.mubr.f32.mxu0 0.0
    %3139 = vmatmul.mubr.f32.gmra.mxu0 %v3003
    %v3140 = vpop.f32.mrf.mxu0
    %v3141 = vadd.f32 0.0, %v3140
    %v3142 = vpop.f32.mrf.mxu0
    %3143 = vmatprep.mubr.f32.mxu0 0.0
    %3144 = vmatmul.mubr.f32.gmra.mxu0 %v3006
    %v3145 = vpop.f32.mrf.mxu0
    %v3146 = vadd.f32 0.0, %v3145
    %v3147 = vpop.f32.mrf.mxu0
    %3148 = vmatprep.mubr.f32.mxu0 0.0
    %3149 = vmatmul.mubr.f32.gmra.mxu0 %v3009
    %v3150 = vpop.f32.mrf.mxu0
    %v3151 = vadd.f32 0.0, %v3150
    %v3152 = vpop.f32.mrf.mxu0
    %3153 = vmatprep.mubr.f32.mxu0 0.0
    %3154 = vmatmul.mubr.f32.gmra.mxu0 %v3012
    %v3155 = vpop.f32.mrf.mxu0
    %v3156 = vadd.f32 0.0, %v3155
    %v3157 = vpop.f32.mrf.mxu0
    %3158 = vmatprep.mubr.f32.mxu0 0.0
    %3159 = vmatmul.mubr.f32.gmra.mxu0 %v3015
    %v3160 = vpop.f32.mrf.mxu0
    %v3161 = vadd.f32 0.0, %v3160
    %v3162 = vpop.f32.mrf.mxu0
    %3163 = vmatprep.mubr.f32.mxu0 0.0
    %3164 = vmatmul.mubr.f32.gmra.mxu0 %v3018
    %v3165 = vpop.f32.mrf.mxu0
    %v3166 = vadd.f32 0.0, %v3165
    %v3167 = vpop.f32.mrf.mxu0
    %3168 = vdwg.mxu0
    %v3169 = vmul.f32 %v2605, %v3091
    %v3170 = vmul.f32 %v2608, %v3096
    %v3171 = vmul.f32 %v2613, %v3101
    %v3172 = vmul.f32 %v2616, %v3106
    %v3173 = vmul.f32 %v2621, %v3111
    %v3174 = vmul.f32 %v2624, %v3116
    %v3175 = vmul.f32 %v2629, %v3121
    %v3176 = vmul.f32 %v2632, %v3126
    %v3177 = vmul.f32 %v2637, %v3131
    %v3178 = vmul.f32 %v2640, %v3136
    %v3179 = vmul.f32 %v2645, %v3141
    %v3180 = vmul.f32 %v2648, %v3146
    %v3181 = vmul.f32 %v2653, %v3151
    %v3182 = vmul.f32 %v2656, %v3156
    %v3183 = vmul.f32 %v2661, %v3161
    %v3184 = vmul.f32 %v2664, %v3166
    %v3185 = vadd.f32 %v3169, %v43
    %v3186 = vadd.f32 %v3170, %v44
    %v3187 = vadd.f32 %v3171, %v45
    %v3188 = vadd.f32 %v3172, %v46
    %v3189 = vadd.f32 %v3173, %v47
    %v3190 = vadd.f32 %v3174, %v48
    %v3191 = vadd.f32 %v3175, %v49
    %v3192 = vadd.f32 %v3176, %v50
    %v3193 = vadd.f32 %v3177, %v51
    %v3194 = vadd.f32 %v3178, %v52
    %v3195 = vadd.f32 %v3179, %v53
    %v3196 = vadd.f32 %v3180, %v54
    %v3197 = vadd.f32 %v3181, %v55
    %v3198 = vadd.f32 %v3182, %v56
    %v3199 = vadd.f32 %v3183, %v57
    %v3200 = vadd.f32 %v3184, %v58
    %3201 = vst [vmem:[#allocation2] sm:$0xff] %v3185
    %3202 = vst [vmem:[#allocation2 + $0x8] sm:$0xff] %v3186
    %3203 = vst [vmem:[#allocation2 + $0x10] sm:$0xff] %v3187
    %3204 = vst [vmem:[#allocation2 + $0x18] sm:$0xff] %v3188
    %3205 = vst [vmem:[#allocation2 + $0x20] sm:$0xff] %v3189
    %3206 = vst [vmem:[#allocation2 + $0x28] sm:$0xff] %v3190
    %3207 = vst [vmem:[#allocation2 + $0x30] sm:$0xff] %v3191
    %3208 = vst [vmem:[#allocation2 + $0x38] sm:$0xff] %v3192
    %3209 = vst [vmem:[#allocation2 + $0x40] sm:$0xff] %v3193
    %3210 = vst [vmem:[#allocation2 + $0x48] sm:$0xff] %v3194
    %3211 = vst [vmem:[#allocation2 + $0x50] sm:$0xff] %v3195
    %3212 = vst [vmem:[#allocation2 + $0x58] sm:$0xff] %v3196
    %3213 = vst [vmem:[#allocation2 + $0x60] sm:$0xff] %v3197
    %3214 = vst [vmem:[#allocation2 + $0x68] sm:$0xff] %v3198
    %3215 = vst [vmem:[#allocation2 + $0x70] sm:$0xff] %v3199
    %3216 = vst [vmem:[#allocation2 + $0x78] sm:$0xff] %v3200
    // Predicated region
    $region50: #{tpu_custom_call.1} parent=1 // pred_check
      _
    $region51: #{tpu_custom_call.1} parent=1 // pred_check_branch
      %3218 = sbr.rel (0) target = $region53
    $region52: #{tpu_custom_call.1} parent=1 // pred_region
      %s3220 = ssub.s32 2048, 2048
      %3221 = vsyncadd [#allocation3], %s3220
      %s3222 = sshll.u32 [#allocation2], 4
      %s3223 = int_to_ptr.vmem [resolvable:$true] %s3222
      %3228 = dma.vmem_to_hbm [thread:$0]  %s3223, 2048, %s12, [#allocation3], 128, 128, 8
    $region53: #{tpu_custom_call.1} parent=1 // pred_fallthru
      _
    // Predicated region
    $region54: #{tpu_custom_call.1} parent=1 // pred_check
      _
    $region55: #{tpu_custom_call.1} parent=1 // pred_check_branch
      %3230 = sbr.rel (0) target = $region57
    $region56: #{tpu_custom_call.1} parent=1 // pred_region
      %3231 = dma.done [#allocation3], 2048
    $region57: #{tpu_custom_call.1} parent=1 // pred_fallthru
      _
    %3232 = vsyncpa [#allocation3], 1

</llo_original>
